<compile_context>
chip_gen: v5e
topology: v5e:2x2
jax: 0.10.0
libtpu: 0.0.40
codegen_flags: <defaults>
</compile_context>

<pallas_src>
import jax
import jax.numpy as jnp
from jax.experimental import pallas as pl
from jax.experimental.pallas import tpu as pltpu

BN_EPS = 1e-5
OUT_LANES = 128          # packed output: lane 0 = mu, lane 1 = sigma
MAX_TILE_B = 512         # default batch rows per grid step
VEC_ROWS = 24            # rows of the packed per-layer vector slab (16 params + w4 row + pad)


def _round_up(n, m):
    return ((n + m - 1) // m) * m


def _softplus(x):
    # numerically stable; matches torch.nn.functional.softplus (linear above threshold=20)
    return jnp.where(x > 20.0, x, jnp.log1p(jnp.exp(jnp.minimum(x, 20.0))))


def _mm(a, b):
    # [M, K] x [K, N] -> [M, N]; weights are pre-transposed in the wrapper so every matmul
    # is NN (no in-kernel weight transpose/relayout).
    return jax.lax.dot_general(a, b, (((1,), (0,)), ((), ())),
                               preferred_element_type=jnp.float32)


# --------------------------- stats kernel (sequential sweeps) ---------------------------
def _make_stats_kernel(dims, batch, tile_b, n_tiles):
    _, l1, l2, l3, l4 = dims
    widths = (l1, l2, l3, l4)
    inv_b = 1.0 / batch

    def kernel(x_ref, w1t_ref, w2t_ref, w3t_ref, w4t_ref, vecs_ref,
               stats_ref, acc_ref):
        l = pl.program_id(0)          # BN-layer sweep (sequential dependency)
        t = pl.program_id(1)          # batch tile (sequential: stats accumulate)

        @pl.when((l == 0) & (t == 0))
        def _init():
            acc_ref[...] = jnp.zeros_like(acc_ref)
            stats_ref[0:4, :] = jnp.zeros((4, 128), jnp.float32)      # means
            stats_ref[4:8, :] = jnp.ones((4, 128), jnp.float32)       # inv_std placeholder

        x = x_ref[...]
        vecs = vecs_ref[...]
        wts = (w1t_ref[...], w2t_ref[...], w3t_ref[...], w4t_ref[...])

        # mask padded batch rows out of the statistics
        gidx = jax.lax.broadcasted_iota(jnp.int32, (tile_b, 1), 0) + t * tile_b
        valid = (gidx < batch).astype(jnp.float32)                    # [tile_b, 1]

        mu_in = x
        for i in range(4):
            w_out = widths[i]
            bias = vecs[4 * i:4 * i + 1, 0:w_out]
            mu_pre = _mm(mu_in, wts[i]) + bias                        # [tile_b, w_out]

            @pl.when(l == i)
            def _accumulate(mu_pre=mu_pre, i=i, w_out=w_out):
                vm = valid * mu_pre
                acc_ref[i:i + 1, 0:w_out] = (
                    acc_ref[i:i + 1, 0:w_out]
                    + jnp.sum(vm, axis=0, keepdims=True))
                acc_ref[4 + i:5 + i, 0:w_out] = (
                    acc_ref[4 + i:5 + i, 0:w_out]
                    + jnp.sum(vm * mu_pre, axis=0, keepdims=True))

            @pl.when((l == i) & (t == n_tiles - 1))
            def _finalize(i=i, w_out=w_out):
                mean = acc_ref[i:i + 1, 0:w_out] * inv_b
                var = jnp.maximum(acc_ref[4 + i:5 + i, 0:w_out] * inv_b - mean * mean, 0.0)
                stats_ref[i:i + 1, 0:w_out] = mean
                stats_ref[4 + i:5 + i, 0:w_out] = jax.lax.rsqrt(var + BN_EPS)

            if i < 3:
                # BN(affine)+ReLU with layer-i stats; only meaningful (and only consumed)
                # on sweeps l > i — earlier sweeps compute finite garbage that is never
                # accumulated (stats rows were initialized to mean=0 / inv_std=1).
                mean = stats_ref[i:i + 1, 0:w_out]
                istd = stats_ref[4 + i:5 + i, 0:w_out]
                gam = vecs[4 * i + 2:4 * i + 3, 0:w_out]
                bet = vecs[4 * i + 3:4 * i + 4, 0:w_out]
                mu_in = jnp.maximum((mu_pre - mean) * istd * gam + bet, 0.0)

    return kernel


# --------------------------- forward kernel (parallel over tiles) -----------------------
def _make_fwd_kernel(dims, tile_b):
    _, l1, l2, l3, l4 = dims

    def kernel(stats_ref, x_ref, w1t_ref, w2t_ref, w3t_ref, w4t_ref,
               w2_ref, w3_ref, vecs_ref, out_ref):
        f32 = jnp.float32
        stats = stats_ref[...]
        vecs = vecs_ref[...]
        x = x_ref[...]                                          # [tile_b, d_in]

        w1t, w2t = w1t_ref[...], w2t_ref[...]
        w3t, w4t = w3t_ref[...], w4t_ref[...]
        w2, w3 = w2_ref[...], w3_ref[...]
        w4row = vecs[16:17, 0:l3]                               # W4 as a [1, l3] row

        def layer_vecs(i, w_out):
            b = vecs[4 * i:4 * i + 1, 0:w_out]
            sp = _softplus(vecs[4 * i + 1:4 * i + 2, 0:w_out])
            return b, sp

        def bn(mu, i, w_out):
            mean = stats[i:i + 1, 0:w_out]
            istd = stats[4 + i:5 + i, 0:w_out]
            gam = vecs[4 * i + 2:4 * i + 3, 0:w_out]
            bet = vecs[4 * i + 3:4 * i + 4, 0:w_out]
            return (mu - mean) * istd * gam + bet

        # ---- layer 1 (input layer): Sigma1 is purely diagonal -> carried as a vector ----
        b1, sp1 = layer_vecs(0, l1)
        mu = _mm(x, w1t) + b1                                             # [tile_b, l1]
        v1 = jnp.sum(x * x, axis=1, keepdims=True) * sp1                  # diag(Sigma1)
        mu = bn(mu, 0, l1)
        d1 = (mu > 0).astype(f32)
        mu1 = jnp.maximum(mu, 0.0)
        s1 = v1 * d1                                                      # diag(Sigma1')

        # ---- layer 2 ----
        b2, sp2 = layer_vecs(1, l2)
        mu = _mm(mu1, w2t) + b2                                           # [tile_b, l2]
        var2 = (jnp.sum(s1, axis=1, keepdims=True)
                + jnp.sum(mu1 * mu1, axis=1, keepdims=True)) * sp2
        mu = bn(mu, 1, l2)
        d2 = (mu > 0).astype(f32)
        mu2 = jnp.maximum(mu, 0.0)
        dv2 = d2 * var2                                                   # diag-noise of Sigma2'
        q2 = _mm(s1, w2t * w2t)                                           # diag(W2 diag(s1) W2^T)
        tr2 = jnp.sum(d2 * (q2 + var2), axis=1, keepdims=True)            # tr(Sigma2')

        # ---- layer 3 ----
        b3, sp3 = layer_vecs(2, l3)
        mu = _mm(mu2, w3t) + b3                                           # [tile_b, l3]
        var3 = (tr2 + jnp.sum(mu2 * mu2, axis=1, keepdims=True)) * sp3
        mu = bn(mu, 2, l3)
        d3 = (mu > 0).astype(f32)
        mu3 = jnp.maximum(mu, 0.0)
        # diag(W3 Sigma2' W3^T) via one flat matmul (no [B,n,n] Sigma).  l3 == 8 matches the
        # f32 sublane count so the (tile_b,l3,l2) <-> (tile_b*l3,l2) reshapes stay row-group
        # aligned.
        a3 = w3[None, :, :] * d2[:, None, :]                              # [tile_b, l3, l2]
        m3 = _mm(a3.reshape(tile_b * l3, l2), w2).reshape(tile_b, l3, l1)
        q3 = jnp.sum(m3 * m3 * s1[:, None, :], axis=2) + _mm(dv2, w3t * w3t)   # [tile_b, l3]
        tr3 = jnp.sum(d3 * (q3 + var3), axis=1, keepdims=True)            # tr(Sigma3')

        # ---- layer 4 (out_features = 1) ----
        b4, sp4 = layer_vecs(3, l4)
        mu = _mm(mu3, w4t) + b4                                           # [tile_b, 1]
        var4 = (tr3 + jnp.sum(mu3 * mu3, axis=1, keepdims=True)) * sp4
        mu4 = bn(mu, 3, l4)

        # sigma4 = W4 Sigma3' W4^T + var4 with the dense Sigmas folded analytically
        g = w4row * d3                                                    # [tile_b, l3]
        h = _mm(g, w3)                                                    # [tile_b, l2]
        e = h * d2
        f = _mm(e, w2)                                                    # [tile_b, l1]
        sig4 = (jnp.sum(f * f * s1, axis=1, keepdims=True)
                + jnp.sum(e * e * var2, axis=1, keepdims=True)
                + jnp.sum(g * g * var3, axis=1, keepdims=True)
                + var4)                                                   # [tile_b, 1]

        # lane-dense packed output tile: col 0 = mu, col 1 = sigma
        out_ref[...] = jnp.zeros_like(out_ref)
        out_ref[:, 0:1] = mu4
        out_ref[:, 1:2] = sig4

    return kernel


# --------------------------------------- wrapper ----------------------------------------
def vdp_forward(x, params, tile_b=None):
    """x: [B, d_in]; params: 4 tuples (w[out,in], b[out], rho[out], gamma[out], beta[out])."""
    batch, d_in = x.shape
    widths = [p[0].shape[0] for p in params]
    l1, l2, l3, l4 = widths
    assert l4 == 1 and max(widths) <= 128

    dims = (d_in, l1, l2, l3, l4)
    if tile_b is None:
        tile_b = MAX_TILE_B if batch >= MAX_TILE_B else _round_up(batch, 8)
    tile_b = _round_up(int(tile_b), 8)
    b_pad = _round_up(batch, tile_b)
    n_tiles = b_pad // tile_b

    x = x.astype(jnp.float32)
    if b_pad != batch:
        x = jnp.pad(x, ((0, b_pad - batch), (0, 0)))

    # weights pre-transposed to [in, out] -> every in-kernel matmul is NN;
    # w2/w3 also passed untransposed for the folded covariance (quadratic-form) path.
    w1t = params[0][0].T.astype(jnp.float32)
    w2t = params[1][0].T.astype(jnp.float32)
    w3t = params[2][0].T.astype(jnp.float32)
    w4t = params[3][0].T.astype(jnp.float32)
    w2 = params[1][0].astype(jnp.float32)
    w3 = params[2][0].astype(jnp.float32)

    # pack the 16 per-layer vectors + the w4 row into one lane-dense slab (single DMA)
    vecs = jnp.zeros((VEC_ROWS, 128), jnp.float32)
    for i, (w, b, rho, gamma, beta) in enumerate(params):
        w_out = w.shape[0]
        vecs = vecs.at[4 * i + 0, :w_out].set(b.astype(jnp.float32))
        vecs = vecs.at[4 * i + 1, :w_out].set(rho.astype(jnp.float32))
        vecs = vecs.at[4 * i + 2, :w_out].set(gamma.astype(jnp.float32))
        vecs = vecs.at[4 * i + 3, :w_out].set(beta.astype(jnp.float32))
    vecs = vecs.at[16, :l3].set(params[3][0].reshape(-1).astype(jnp.float32))

    def resident2(arr):   # grid-invariant input, 2-D grid: fetched once, stays in VMEM
        return pl.BlockSpec(arr.shape, lambda l, t: (0, 0))

    def resident1(arr):   # grid-invariant input, 1-D grid
        return pl.BlockSpec(arr.shape, lambda t: (0, 0))

    # --- pass 1: full-batch BatchNorm statistics (sequential layer sweeps x batch tiles) ---
    stats = pl.pallas_call(
        _make_stats_kernel(dims, batch, tile_b, n_tiles),
        out_shape=jax.ShapeDtypeStruct((8, 128), jnp.float32),
        grid_spec=pltpu.PrefetchScalarGridSpec(
            num_scalar_prefetch=0,
            grid=(4, n_tiles),
            in_specs=[
                pl.BlockSpec((tile_b, d_in), lambda l, t: (t, 0)),
                resident2(w1t), resident2(w2t), resident2(w3t), resident2(w4t),
                resident2(vecs),
            ],
            out_specs=pl.BlockSpec((8, 128), lambda l, t: (0, 0)),
            scratch_shapes=[pltpu.VMEM((8, 128), jnp.float32)],
        ),
        compiler_params=pltpu.CompilerParams(
            dimension_semantics=("arbitrary", "arbitrary")),
    )(x, w1t, w2t, w3t, w4t, vecs)

    # --- pass 2: full forward (mu + folded sigma), batch tiles independent -> parallel ---
    packed = pl.pallas_call(
        _make_fwd_kernel(dims, tile_b),
        out_shape=jax.ShapeDtypeStruct((b_pad, OUT_LANES), jnp.float32),
        grid_spec=pltpu.PrefetchScalarGridSpec(
            num_scalar_prefetch=0,
            grid=(n_tiles,),
            in_specs=[
                pl.BlockSpec((8, 128), lambda t: (0, 0)),          # BN stats (resident)
                pl.BlockSpec((tile_b, d_in), lambda t: (t, 0)),    # x tile
                resident1(w1t), resident1(w2t), resident1(w3t), resident1(w4t),
                resident1(w2), resident1(w3), resident1(vecs),
            ],
            out_specs=pl.BlockSpec((tile_b, OUT_LANES), lambda t: (t, 0)),
        ),
        compiler_params=pltpu.CompilerParams(dimension_semantics=("parallel",)),
    )(stats, x, w1t, w2t, w3t, w4t, w2, w3, vecs)

    mu = packed[:batch, 0:1]
    sigma = packed[:batch, 1:2].reshape(batch, 1, 1)
    return mu, sigma


# ---------------- pure-JAX reference (dense VDP propagation, same semantics) ----------------
def vdp_forward_ref(x, params):
    def bn(mu):
        m = jnp.mean(mu, axis=0, keepdims=True)
        v = jnp.mean((mu - m) ** 2, axis=0, keepdims=True)
        return (mu - m) / jnp.sqrt(v + BN_EPS)

    def fc(mu, sigma, w, b, rho):
        out = w.shape[0]
        mu_y = mu @ w.T + b[None, :]
        sw = _softplus(rho)
        musq = jnp.sum(mu * mu, axis=1)
        eye = jnp.eye(out, dtype=mu.dtype)
        if sigma is None:
            return mu_y, (musq[:, None] * sw[None, :])[:, :, None] * eye[None]
        t1 = jnp.einsum('oi,bij,pj->bop', w, sigma, w)
        tr = jnp.trace(sigma, axis1=1, axis2=2)
        var = (tr + musq)[:, None] * sw[None, :]
        return mu_y, t1 + var[:, :, None] * eye[None]

    def relu(mu, sigma):
        d = (mu > 0).astype(mu.dtype)
        return jnp.maximum(mu, 0.0), sigma * d[:, :, None] * d[:, None, :]

    mu, sig = x, None
    for i, (w, b, rho, g, be) in enumerate(params):
        mu, sig = fc(mu, sig, w, b, rho)
        mu = bn(mu) * g[None, :] + be[None, :]
        if i < 3:
            mu, sig = relu(mu, sig)
    return mu, sig


if __name__ == "__main__":
    layer_1, layer_2, layer_3 = 32, 16, 8
    dims = [12, layer_1, layer_2, layer_3, 1]

    key = jax.random.PRNGKey(0)
    params = []
    for i in range(4):
        key, k1, k2, k3 = jax.random.split(key, 4)
        fan_in, fan_out = dims[i], dims[i + 1]
        w = jax.random.normal(k1, (fan_out, fan_in), jnp.float32) * 0.3
        b = jax.random.normal(k2, (fan_out,), jnp.float32) * 0.1
        rho = jax.random.normal(k3, (fan_out,), jnp.float32) * 0.5 - 2.0
        gamma = jnp.ones((fan_out,), jnp.float32)   # PyTorch BatchNorm1d defaults
        beta = jnp.zeros((fan_out,), jnp.float32)
        params.append((w, b, rho, gamma, beta))

    fwd = jax.jit(vdp_forward, static_argnames=("tile_b",))

    # single-tile path
    key, kx = jax.random.split(key)
    x = jax.random.normal(kx, (8, 12), jnp.float32)
    mu_k, sig_k = fwd(x, params)
    jax.block_until_ready((mu_k, sig_k))
    mu_r, sig_r = vdp_forward_ref(x, params)
    assert mu_k.shape == (8, 1) and sig_k.shape == (8, 1, 1)
    assert jnp.allclose(mu_k, mu_r, atol=1e-2, rtol=1e-2)
    assert jnp.allclose(sig_k, sig_r, atol=1e-2, rtol=1e-2)

    # multi-tile path: exercises cross-tile BatchNorm accumulation + ragged-row masking
    key, kx2 = jax.random.split(key)
    x2 = jax.random.normal(kx2, (20, 12), jnp.float32)
    mu_k2, sig_k2 = fwd(x2, params, tile_b=8)
    jax.block_until_ready((mu_k2, sig_k2))
    mu_r2, sig_r2 = vdp_forward_ref(x2, params)
    assert mu_k2.shape == (20, 1) and sig_k2.shape == (20, 1, 1)
    assert jnp.allclose(mu_k2, mu_r2, atol=1e-2, rtol=1e-2)
    assert jnp.allclose(sig_k2, sig_r2, atol=1e-2, rtol=1e-2)

    print("KERNEL_OK")
</pallas_src>

<mosaic_0001>
module attributes {stable_mosaic.version = 11 : i64} {
  func.func @kernel(%arg0: i32, %arg1: memref<8x128xf32, #tpu.memory_space<vmem>>, %arg2: memref<8x12xf32, #tpu.memory_space<vmem>>, %arg3: memref<12x32xf32, #tpu.memory_space<vmem>>, %arg4: memref<32x16xf32, #tpu.memory_space<vmem>>, %arg5: memref<16x8xf32, #tpu.memory_space<vmem>>, %arg6: memref<8x1xf32, #tpu.memory_space<vmem>>, %arg7: memref<16x32xf32, #tpu.memory_space<vmem>>, %arg8: memref<8x16xf32, #tpu.memory_space<vmem>>, %arg9: memref<24x128xf32, #tpu.memory_space<vmem>>, %arg10: memref<8x128xf32, #tpu.memory_space<vmem>>) attributes {dimension_semantics = [#tpu.dimension_semantics<parallel>], iteration_bounds = array<i64: 1>, scalar_prefetch = 0 : i64, scratch_operands = 0 : i64, tpu.core_type = #tpu.core_type<tc>, window_params = [{pipeline_mode = #tpu.pipeline_mode<synchronous>, transform_indices = @transform_0, window_bounds = array<i64: 8, 128>}, {transform_indices = @transform_1, window_bounds = array<i64: 8, 12>}, {pipeline_mode = #tpu.pipeline_mode<synchronous>, transform_indices = @transform_2, window_bounds = array<i64: 12, 32>}, {pipeline_mode = #tpu.pipeline_mode<synchronous>, transform_indices = @transform_3, window_bounds = array<i64: 32, 16>}, {pipeline_mode = #tpu.pipeline_mode<synchronous>, transform_indices = @transform_4, window_bounds = array<i64: 16, 8>}, {pipeline_mode = #tpu.pipeline_mode<synchronous>, transform_indices = @transform_5, window_bounds = array<i64: 8, 1>}, {pipeline_mode = #tpu.pipeline_mode<synchronous>, transform_indices = @transform_6, window_bounds = array<i64: 16, 32>}, {pipeline_mode = #tpu.pipeline_mode<synchronous>, transform_indices = @transform_7, window_bounds = array<i64: 8, 16>}, {pipeline_mode = #tpu.pipeline_mode<synchronous>, transform_indices = @transform_8, window_bounds = array<i64: 24, 128>}, {transform_indices = @transform_9, window_bounds = array<i64: 8, 128>}]} {
    %c0 = arith.constant 0 : index
    %c0_0 = arith.constant 0 : index
    %0 = vector.load %arg1[%c0, %c0_0] : memref<8x128xf32, #tpu.memory_space<vmem>>, vector<8x128xf32>
    %c0_1 = arith.constant 0 : index
    %c0_2 = arith.constant 0 : index
    %1 = vector.load %arg9[%c0_1, %c0_2] : memref<24x128xf32, #tpu.memory_space<vmem>>, vector<24x128xf32>
    %c0_3 = arith.constant 0 : index
    %c0_4 = arith.constant 0 : index
    %2 = vector.load %arg2[%c0_3, %c0_4] : memref<8x12xf32, #tpu.memory_space<vmem>>, vector<8x12xf32>
    %c0_5 = arith.constant 0 : index
    %c0_6 = arith.constant 0 : index
    %3 = vector.load %arg3[%c0_5, %c0_6] : memref<12x32xf32, #tpu.memory_space<vmem>>, vector<12x32xf32>
    %c0_7 = arith.constant 0 : index
    %c0_8 = arith.constant 0 : index
    %4 = vector.load %arg4[%c0_7, %c0_8] : memref<32x16xf32, #tpu.memory_space<vmem>>, vector<32x16xf32>
    %c0_9 = arith.constant 0 : index
    %c0_10 = arith.constant 0 : index
    %5 = vector.load %arg5[%c0_9, %c0_10] : memref<16x8xf32, #tpu.memory_space<vmem>>, vector<16x8xf32>
    %c0_11 = arith.constant 0 : index
    %c0_12 = arith.constant 0 : index
    %6 = vector.load %arg6[%c0_11, %c0_12] : memref<8x1xf32, #tpu.memory_space<vmem>>, vector<8x1xf32>
    %c0_13 = arith.constant 0 : index
    %c0_14 = arith.constant 0 : index
    %7 = vector.load %arg7[%c0_13, %c0_14] : memref<16x32xf32, #tpu.memory_space<vmem>>, vector<16x32xf32>
    %c0_15 = arith.constant 0 : index
    %c0_16 = arith.constant 0 : index
    %8 = vector.load %arg8[%c0_15, %c0_16] : memref<8x16xf32, #tpu.memory_space<vmem>>, vector<8x16xf32>
    %9 = vector.extract_strided_slice %1 {offsets = [16, 0], sizes = [1, 8], strides = [1, 1]} : vector<24x128xf32> to vector<1x8xf32>
    %10 = vector.extract_strided_slice %1 {offsets = [0, 0], sizes = [1, 32], strides = [1, 1]} : vector<24x128xf32> to vector<1x32xf32>
    %11 = vector.extract_strided_slice %1 {offsets = [1, 0], sizes = [1, 32], strides = [1, 1]} : vector<24x128xf32> to vector<1x32xf32>
    %cst = arith.constant 2.000000e+01 : f32
    %12 = vector.broadcast %cst : f32 to vector<1x32xf32>
    %13 = arith.cmpf ogt, %11, %12 : vector<1x32xf32>
    %cst_17 = arith.constant 2.000000e+01 : f32
    %14 = vector.broadcast %cst_17 : f32 to vector<1x32xf32>
    %15 = arith.minimumf %11, %14 : vector<1x32xf32>
    %16 = math.exp %15 : vector<1x32xf32>
    %17 = math.log1p %16 : vector<1x32xf32>
    %18 = arith.select %13, %11, %17 : vector<1x32xi1>, vector<1x32xf32>
    %cst_18 = arith.constant dense<0.000000e+00> : vector<8x32xf32>
    %19 = tpu.matmul %2, %3, %cst_18 {dimension_numbers = #tpu.dot_dimension_numbers<[1], [0], [0], [1], [0, 0, 1, 1], [], []>} : vector<8x12xf32>, vector<12x32xf32>, vector<8x32xf32> -> vector<8x32xf32>
    %20 = vector.broadcast %10 : vector<1x32xf32> to vector<8x32xf32>
    %21 = arith.addf %19, %20 : vector<8x32xf32>
    %22 = arith.mulf %2, %2 : vector<8x12xf32>
    %cst_19 = arith.constant dense<0.000000e+00> : vector<8xf32>
    %23 = vector.multi_reduction <add>, %22, %cst_19 [1] : vector<8x12xf32> to vector<8xf32>
    %24 = vector.shape_cast %23 : vector<8xf32> to vector<8x1xf32>
    %25 = vector.broadcast %24 : vector<8x1xf32> to vector<8x32xf32>
    %26 = vector.broadcast %18 : vector<1x32xf32> to vector<8x32xf32>
    %27 = arith.mulf %25, %26 : vector<8x32xf32>
    %28 = vector.extract_strided_slice %0 {offsets = [0, 0], sizes = [1, 32], strides = [1, 1]} : vector<8x128xf32> to vector<1x32xf32>
    %29 = vector.extract_strided_slice %0 {offsets = [4, 0], sizes = [1, 32], strides = [1, 1]} : vector<8x128xf32> to vector<1x32xf32>
    %30 = vector.extract_strided_slice %1 {offsets = [2, 0], sizes = [1, 32], strides = [1, 1]} : vector<24x128xf32> to vector<1x32xf32>
    %31 = vector.extract_strided_slice %1 {offsets = [3, 0], sizes = [1, 32], strides = [1, 1]} : vector<24x128xf32> to vector<1x32xf32>
    %32 = vector.broadcast %28 : vector<1x32xf32> to vector<8x32xf32>
    %33 = arith.subf %21, %32 : vector<8x32xf32>
    %34 = vector.broadcast %29 : vector<1x32xf32> to vector<8x32xf32>
    %35 = arith.mulf %33, %34 : vector<8x32xf32>
    %36 = vector.broadcast %30 : vector<1x32xf32> to vector<8x32xf32>
    %37 = arith.mulf %35, %36 : vector<8x32xf32>
    %38 = vector.broadcast %31 : vector<1x32xf32> to vector<8x32xf32>
    %39 = arith.addf %37, %38 : vector<8x32xf32>
    %cst_20 = arith.constant 0.000000e+00 : f32
    %40 = vector.broadcast %cst_20 : f32 to vector<8x32xf32>
    %41 = arith.cmpf ogt, %39, %40 : vector<8x32xf32>
    %42 = arith.extui %41 : vector<8x32xi1> to vector<8x32xi32>
    %43 = arith.sitofp %42 : vector<8x32xi32> to vector<8x32xf32>
    %cst_21 = arith.constant 0.000000e+00 : f32
    %44 = vector.broadcast %cst_21 : f32 to vector<8x32xf32>
    %45 = arith.maximumf %39, %44 : vector<8x32xf32>
    %46 = arith.mulf %27, %43 : vector<8x32xf32>
    %47 = vector.extract_strided_slice %1 {offsets = [4, 0], sizes = [1, 16], strides = [1, 1]} : vector<24x128xf32> to vector<1x16xf32>
    %48 = vector.extract_strided_slice %1 {offsets = [5, 0], sizes = [1, 16], strides = [1, 1]} : vector<24x128xf32> to vector<1x16xf32>
    %cst_22 = arith.constant 2.000000e+01 : f32
    %49 = vector.broadcast %cst_22 : f32 to vector<1x16xf32>
    %50 = arith.cmpf ogt, %48, %49 : vector<1x16xf32>
    %cst_23 = arith.constant 2.000000e+01 : f32
    %51 = vector.broadcast %cst_23 : f32 to vector<1x16xf32>
    %52 = arith.minimumf %48, %51 : vector<1x16xf32>
    %53 = math.exp %52 : vector<1x16xf32>
    %54 = math.log1p %53 : vector<1x16xf32>
    %55 = arith.select %50, %48, %54 : vector<1x16xi1>, vector<1x16xf32>
    %cst_24 = arith.constant dense<0.000000e+00> : vector<8x16xf32>
    %56 = tpu.matmul %45, %4, %cst_24 {dimension_numbers = #tpu.dot_dimension_numbers<[1], [0], [0], [1], [0, 0, 1, 1], [], []>} : vector<8x32xf32>, vector<32x16xf32>, vector<8x16xf32> -> vector<8x16xf32>
    %57 = vector.broadcast %47 : vector<1x16xf32> to vector<8x16xf32>
    %58 = arith.addf %56, %57 : vector<8x16xf32>
    %cst_25 = arith.constant dense<0.000000e+00> : vector<8xf32>
    %59 = vector.multi_reduction <add>, %46, %cst_25 [1] : vector<8x32xf32> to vector<8xf32>
    %60 = vector.shape_cast %59 : vector<8xf32> to vector<8x1xf32>
    %61 = arith.mulf %45, %45 : vector<8x32xf32>
    %cst_26 = arith.constant dense<0.000000e+00> : vector<8xf32>
    %62 = vector.multi_reduction <add>, %61, %cst_26 [1] : vector<8x32xf32> to vector<8xf32>
    %63 = vector.shape_cast %62 : vector<8xf32> to vector<8x1xf32>
    %64 = arith.addf %60, %63 : vector<8x1xf32>
    %65 = vector.broadcast %64 : vector<8x1xf32> to vector<8x16xf32>
    %66 = vector.broadcast %55 : vector<1x16xf32> to vector<8x16xf32>
    %67 = arith.mulf %65, %66 : vector<8x16xf32>
    %68 = vector.extract_strided_slice %0 {offsets = [1, 0], sizes = [1, 16], strides = [1, 1]} : vector<8x128xf32> to vector<1x16xf32>
    %69 = vector.extract_strided_slice %0 {offsets = [5, 0], sizes = [1, 16], strides = [1, 1]} : vector<8x128xf32> to vector<1x16xf32>
    %70 = vector.extract_strided_slice %1 {offsets = [6, 0], sizes = [1, 16], strides = [1, 1]} : vector<24x128xf32> to vector<1x16xf32>
    %71 = vector.extract_strided_slice %1 {offsets = [7, 0], sizes = [1, 16], strides = [1, 1]} : vector<24x128xf32> to vector<1x16xf32>
    %72 = vector.broadcast %68 : vector<1x16xf32> to vector<8x16xf32>
    %73 = arith.subf %58, %72 : vector<8x16xf32>
    %74 = vector.broadcast %69 : vector<1x16xf32> to vector<8x16xf32>
    %75 = arith.mulf %73, %74 : vector<8x16xf32>
    %76 = vector.broadcast %70 : vector<1x16xf32> to vector<8x16xf32>
    %77 = arith.mulf %75, %76 : vector<8x16xf32>
    %78 = vector.broadcast %71 : vector<1x16xf32> to vector<8x16xf32>
    %79 = arith.addf %77, %78 : vector<8x16xf32>
    %cst_27 = arith.constant 0.000000e+00 : f32
    %80 = vector.broadcast %cst_27 : f32 to vector<8x16xf32>
    %81 = arith.cmpf ogt, %79, %80 : vector<8x16xf32>
    %82 = arith.extui %81 : vector<8x16xi1> to vector<8x16xi32>
    %83 = arith.sitofp %82 : vector<8x16xi32> to vector<8x16xf32>
    %cst_28 = arith.constant 0.000000e+00 : f32
    %84 = vector.broadcast %cst_28 : f32 to vector<8x16xf32>
    %85 = arith.maximumf %79, %84 : vector<8x16xf32>
    %86 = arith.mulf %83, %67 : vector<8x16xf32>
    %87 = arith.mulf %4, %4 : vector<32x16xf32>
    %cst_29 = arith.constant dense<0.000000e+00> : vector<8x16xf32>
    %88 = tpu.matmul %46, %87, %cst_29 {dimension_numbers = #tpu.dot_dimension_numbers<[1], [0], [0], [1], [0, 0, 1, 1], [], []>} : vector<8x32xf32>, vector<32x16xf32>, vector<8x16xf32> -> vector<8x16xf32>
    %89 = arith.addf %88, %67 : vector<8x16xf32>
    %90 = arith.mulf %83, %89 : vector<8x16xf32>
    %cst_30 = arith.constant dense<0.000000e+00> : vector<8xf32>
    %91 = vector.multi_reduction <add>, %90, %cst_30 [1] : vector<8x16xf32> to vector<8xf32>
    %92 = vector.shape_cast %91 : vector<8xf32> to vector<8x1xf32>
    %93 = vector.extract_strided_slice %1 {offsets = [8, 0], sizes = [1, 8], strides = [1, 1]} : vector<24x128xf32> to vector<1x8xf32>
    %94 = vector.extract_strided_slice %1 {offsets = [9, 0], sizes = [1, 8], strides = [1, 1]} : vector<24x128xf32> to vector<1x8xf32>
    %cst_31 = arith.constant 2.000000e+01 : f32
    %95 = vector.broadcast %cst_31 : f32 to vector<1x8xf32>
    %96 = arith.cmpf ogt, %94, %95 : vector<1x8xf32>
    %cst_32 = arith.constant 2.000000e+01 : f32
    %97 = vector.broadcast %cst_32 : f32 to vector<1x8xf32>
    %98 = arith.minimumf %94, %97 : vector<1x8xf32>
    %99 = math.exp %98 : vector<1x8xf32>
    %100 = math.log1p %99 : vector<1x8xf32>
    %101 = arith.select %96, %94, %100 : vector<1x8xi1>, vector<1x8xf32>
    %cst_33 = arith.constant dense<0.000000e+00> : vector<8x8xf32>
    %102 = tpu.matmul %85, %5, %cst_33 {dimension_numbers = #tpu.dot_dimension_numbers<[1], [0], [0], [1], [0, 0, 1, 1], [], []>} : vector<8x16xf32>, vector<16x8xf32>, vector<8x8xf32> -> vector<8x8xf32>
    %103 = vector.broadcast %93 : vector<1x8xf32> to vector<8x8xf32>
    %104 = arith.addf %102, %103 : vector<8x8xf32>
    %105 = arith.mulf %85, %85 : vector<8x16xf32>
    %cst_34 = arith.constant dense<0.000000e+00> : vector<8xf32>
    %106 = vector.multi_reduction <add>, %105, %cst_34 [1] : vector<8x16xf32> to vector<8xf32>
    %107 = vector.shape_cast %106 : vector<8xf32> to vector<8x1xf32>
    %108 = arith.addf %92, %107 : vector<8x1xf32>
    %109 = vector.broadcast %108 : vector<8x1xf32> to vector<8x8xf32>
    %110 = vector.broadcast %101 : vector<1x8xf32> to vector<8x8xf32>
    %111 = arith.mulf %109, %110 : vector<8x8xf32>
    %112 = vector.extract_strided_slice %0 {offsets = [2, 0], sizes = [1, 8], strides = [1, 1]} : vector<8x128xf32> to vector<1x8xf32>
    %113 = vector.extract_strided_slice %0 {offsets = [6, 0], sizes = [1, 8], strides = [1, 1]} : vector<8x128xf32> to vector<1x8xf32>
    %114 = vector.extract_strided_slice %1 {offsets = [10, 0], sizes = [1, 8], strides = [1, 1]} : vector<24x128xf32> to vector<1x8xf32>
    %115 = vector.extract_strided_slice %1 {offsets = [11, 0], sizes = [1, 8], strides = [1, 1]} : vector<24x128xf32> to vector<1x8xf32>
    %116 = vector.broadcast %112 : vector<1x8xf32> to vector<8x8xf32>
    %117 = arith.subf %104, %116 : vector<8x8xf32>
    %118 = vector.broadcast %113 : vector<1x8xf32> to vector<8x8xf32>
    %119 = arith.mulf %117, %118 : vector<8x8xf32>
    %120 = vector.broadcast %114 : vector<1x8xf32> to vector<8x8xf32>
    %121 = arith.mulf %119, %120 : vector<8x8xf32>
    %122 = vector.broadcast %115 : vector<1x8xf32> to vector<8x8xf32>
    %123 = arith.addf %121, %122 : vector<8x8xf32>
    %cst_35 = arith.constant 0.000000e+00 : f32
    %124 = vector.broadcast %cst_35 : f32 to vector<8x8xf32>
    %125 = arith.cmpf ogt, %123, %124 : vector<8x8xf32>
    %126 = arith.extui %125 : vector<8x8xi1> to vector<8x8xi32>
    %127 = arith.sitofp %126 : vector<8x8xi32> to vector<8x8xf32>
    %cst_36 = arith.constant 0.000000e+00 : f32
    %128 = vector.broadcast %cst_36 : f32 to vector<8x8xf32>
    %129 = arith.maximumf %123, %128 : vector<8x8xf32>
    %130 = vector.shape_cast %8 : vector<8x16xf32> to vector<1x8x16xf32>
    %131 = vector.shape_cast %83 : vector<8x16xf32> to vector<8x1x16xf32>
    %132 = vector.broadcast %130 : vector<1x8x16xf32> to vector<8x8x16xf32>
    %133 = vector.broadcast %131 : vector<8x1x16xf32> to vector<8x8x16xf32>
    %134 = arith.mulf %132, %133 : vector<8x8x16xf32>
    %135 = vector.shape_cast %134 : vector<8x8x16xf32> to vector<64x16xf32>
    %cst_37 = arith.constant dense<0.000000e+00> : vector<64x32xf32>
    %136 = tpu.matmul %135, %7, %cst_37 {dimension_numbers = #tpu.dot_dimension_numbers<[1], [0], [0], [1], [0, 0, 1, 1], [], []>} : vector<64x16xf32>, vector<16x32xf32>, vector<64x32xf32> -> vector<64x32xf32>
    %137 = vector.shape_cast %136 : vector<64x32xf32> to vector<8x8x32xf32>
    %138 = arith.mulf %137, %137 : vector<8x8x32xf32>
    %139 = vector.shape_cast %46 : vector<8x32xf32> to vector<8x1x32xf32>
    %140 = vector.broadcast %139 : vector<8x1x32xf32> to vector<8x8x32xf32>
    %141 = arith.mulf %138, %140 : vector<8x8x32xf32>
    %cst_38 = arith.constant dense<0.000000e+00> : vector<8x8xf32>
    %142 = vector.multi_reduction <add>, %141, %cst_38 [2] : vector<8x8x32xf32> to vector<8x8xf32>
    %143 = arith.mulf %5, %5 : vector<16x8xf32>
    %cst_39 = arith.constant dense<0.000000e+00> : vector<8x8xf32>
    %144 = tpu.matmul %86, %143, %cst_39 {dimension_numbers = #tpu.dot_dimension_numbers<[1], [0], [0], [1], [0, 0, 1, 1], [], []>} : vector<8x16xf32>, vector<16x8xf32>, vector<8x8xf32> -> vector<8x8xf32>
    %145 = arith.addf %142, %144 : vector<8x8xf32>
    %146 = arith.addf %145, %111 : vector<8x8xf32>
    %147 = arith.mulf %127, %146 : vector<8x8xf32>
    %cst_40 = arith.constant dense<0.000000e+00> : vector<8xf32>
    %148 = vector.multi_reduction <add>, %147, %cst_40 [1] : vector<8x8xf32> to vector<8xf32>
    %149 = vector.shape_cast %148 : vector<8xf32> to vector<8x1xf32>
    %150 = vector.extract_strided_slice %1 {offsets = [12, 0], sizes = [1, 1], strides = [1, 1]} : vector<24x128xf32> to vector<1x1xf32>
    %151 = vector.extract_strided_slice %1 {offsets = [13, 0], sizes = [1, 1], strides = [1, 1]} : vector<24x128xf32> to vector<1x1xf32>
    %cst_41 = arith.constant 2.000000e+01 : f32
    %152 = vector.broadcast %cst_41 : f32 to vector<1x1xf32>
    %153 = arith.cmpf ogt, %151, %152 : vector<1x1xf32>
    %cst_42 = arith.constant 2.000000e+01 : f32
    %154 = vector.broadcast %cst_42 : f32 to vector<1x1xf32>
    %155 = arith.minimumf %151, %154 : vector<1x1xf32>
    %156 = math.exp %155 : vector<1x1xf32>
    %157 = math.log1p %156 : vector<1x1xf32>
    %158 = arith.select %153, %151, %157 : vector<1x1xi1>, vector<1x1xf32>
    %cst_43 = arith.constant dense<0.000000e+00> : vector<8x1xf32>
    %159 = tpu.matmul %129, %6, %cst_43 {dimension_numbers = #tpu.dot_dimension_numbers<[1], [0], [0], [1], [0, 0, 1, 1], [], []>} : vector<8x8xf32>, vector<8x1xf32>, vector<8x1xf32> -> vector<8x1xf32>
    %160 = vector.broadcast %150 : vector<1x1xf32> to vector<8x1xf32>
    %161 = arith.addf %159, %160 : vector<8x1xf32>
    %162 = arith.mulf %129, %129 : vector<8x8xf32>
    %cst_44 = arith.constant dense<0.000000e+00> : vector<8xf32>
    %163 = vector.multi_reduction <add>, %162, %cst_44 [1] : vector<8x8xf32> to vector<8xf32>
    %164 = vector.shape_cast %163 : vector<8xf32> to vector<8x1xf32>
    %165 = arith.addf %149, %164 : vector<8x1xf32>
    %166 = vector.broadcast %158 : vector<1x1xf32> to vector<8x1xf32>
    %167 = arith.mulf %165, %166 : vector<8x1xf32>
    %168 = vector.extract_strided_slice %0 {offsets = [3, 0], sizes = [1, 1], strides = [1, 1]} : vector<8x128xf32> to vector<1x1xf32>
    %169 = vector.extract_strided_slice %0 {offsets = [7, 0], sizes = [1, 1], strides = [1, 1]} : vector<8x128xf32> to vector<1x1xf32>
    %170 = vector.extract_strided_slice %1 {offsets = [14, 0], sizes = [1, 1], strides = [1, 1]} : vector<24x128xf32> to vector<1x1xf32>
    %171 = vector.extract_strided_slice %1 {offsets = [15, 0], sizes = [1, 1], strides = [1, 1]} : vector<24x128xf32> to vector<1x1xf32>
    %172 = vector.broadcast %168 : vector<1x1xf32> to vector<8x1xf32>
    %173 = arith.subf %161, %172 : vector<8x1xf32>
    %174 = vector.broadcast %169 : vector<1x1xf32> to vector<8x1xf32>
    %175 = arith.mulf %173, %174 : vector<8x1xf32>
    %176 = vector.broadcast %170 : vector<1x1xf32> to vector<8x1xf32>
    %177 = arith.mulf %175, %176 : vector<8x1xf32>
    %178 = vector.broadcast %171 : vector<1x1xf32> to vector<8x1xf32>
    %179 = arith.addf %177, %178 : vector<8x1xf32>
    %180 = vector.broadcast %9 : vector<1x8xf32> to vector<8x8xf32>
    %181 = arith.mulf %180, %127 : vector<8x8xf32>
    %cst_45 = arith.constant dense<0.000000e+00> : vector<8x16xf32>
    %182 = tpu.matmul %181, %8, %cst_45 {dimension_numbers = #tpu.dot_dimension_numbers<[1], [0], [0], [1], [0, 0, 1, 1], [], []>} : vector<8x8xf32>, vector<8x16xf32>, vector<8x16xf32> -> vector<8x16xf32>
    %183 = arith.mulf %182, %83 : vector<8x16xf32>
    %cst_46 = arith.constant dense<0.000000e+00> : vector<8x32xf32>
    %184 = tpu.matmul %183, %7, %cst_46 {dimension_numbers = #tpu.dot_dimension_numbers<[1], [0], [0], [1], [0, 0, 1, 1], [], []>} : vector<8x16xf32>, vector<16x32xf32>, vector<8x32xf32> -> vector<8x32xf32>
    %185 = arith.mulf %184, %184 : vector<8x32xf32>
    %186 = arith.mulf %185, %46 : vector<8x32xf32>
    %cst_47 = arith.constant dense<0.000000e+00> : vector<8xf32>
    %187 = vector.multi_reduction <add>, %186, %cst_47 [1] : vector<8x32xf32> to vector<8xf32>
    %188 = vector.shape_cast %187 : vector<8xf32> to vector<8x1xf32>
    %189 = arith.mulf %183, %183 : vector<8x16xf32>
    %190 = arith.mulf %189, %67 : vector<8x16xf32>
    %cst_48 = arith.constant dense<0.000000e+00> : vector<8xf32>
    %191 = vector.multi_reduction <add>, %190, %cst_48 [1] : vector<8x16xf32> to vector<8xf32>
    %192 = vector.shape_cast %191 : vector<8xf32> to vector<8x1xf32>
    %193 = arith.addf %188, %192 : vector<8x1xf32>
    %194 = arith.mulf %181, %181 : vector<8x8xf32>
    %195 = arith.mulf %194, %111 : vector<8x8xf32>
    %cst_49 = arith.constant dense<0.000000e+00> : vector<8xf32>
    %196 = vector.multi_reduction <add>, %195, %cst_49 [1] : vector<8x8xf32> to vector<8xf32>
    %197 = vector.shape_cast %196 : vector<8xf32> to vector<8x1xf32>
    %198 = arith.addf %193, %197 : vector<8x1xf32>
    %199 = arith.addf %198, %167 : vector<8x1xf32>
    %cst_50 = arith.constant 0.000000e+00 : f32
    %200 = vector.broadcast %cst_50 : f32 to vector<8x128xf32>
    %c0_51 = arith.constant 0 : index
    %c0_52 = arith.constant 0 : index
    %201 = vector.load %arg10[%c0_51, %c0_52] : memref<8x128xf32, #tpu.memory_space<vmem>>, vector<8x128xf32>
    tpu.vector_store %arg10[%c0_51, %c0_52], %200 {strides = array<i32>} : memref<8x128xf32, #tpu.memory_space<vmem>>, vector<8x128xf32>,
    %c0_53 = arith.constant 0 : index
    %c0_54 = arith.constant 0 : index
    %202 = vector.load %arg10[%c0_53, %c0_54] : memref<8x128xf32, #tpu.memory_space<vmem>>, vector<8x1xf32>
    tpu.vector_store %arg10[%c0_53, %c0_54], %179 {strides = array<i32>} : memref<8x128xf32, #tpu.memory_space<vmem>>, vector<8x1xf32>,
    %c0_55 = arith.constant 0 : index
    %c1 = arith.constant 1 : index
    %203 = vector.load %arg10[%c0_55, %c1] : memref<8x128xf32, #tpu.memory_space<vmem>>, vector<8x1xf32>
    tpu.vector_store %arg10[%c0_55, %c1], %199 {strides = array<i32>} : memref<8x128xf32, #tpu.memory_space<vmem>>, vector<8x1xf32>,
    return
  }
  func.func @transform_0(%arg0: i32) -> (i32, i32) {
    %c0_i32 = arith.constant 0 : i32
    %c0_i32_0 = arith.constant 0 : i32
    %c0_i32_1 = arith.constant 0 : i32
    return %c0_i32, %c0_i32_0 : i32, i32
  }
  func.func @transform_1(%arg0: i32) -> (i32, i32) {
    %c0_i32 = arith.constant 0 : i32
    %c0_i32_0 = arith.constant 0 : i32
    return %arg0, %c0_i32 : i32, i32
  }
  func.func @transform_2(%arg0: i32) -> (i32, i32) {
    %c0_i32 = arith.constant 0 : i32
    %c0_i32_0 = arith.constant 0 : i32
    %c0_i32_1 = arith.constant 0 : i32
    return %c0_i32, %c0_i32_0 : i32, i32
  }
  func.func @transform_3(%arg0: i32) -> (i32, i32) {
    %c0_i32 = arith.constant 0 : i32
    %c0_i32_0 = arith.constant 0 : i32
    %c0_i32_1 = arith.constant 0 : i32
    return %c0_i32, %c0_i32_0 : i32, i32
  }
  func.func @transform_4(%arg0: i32) -> (i32, i32) {
    %c0_i32 = arith.constant 0 : i32
    %c0_i32_0 = arith.constant 0 : i32
    %c0_i32_1 = arith.constant 0 : i32
    return %c0_i32, %c0_i32_0 : i32, i32
  }
  func.func @transform_5(%arg0: i32) -> (i32, i32) {
    %c0_i32 = arith.constant 0 : i32
    %c0_i32_0 = arith.constant 0 : i32
    %c0_i32_1 = arith.constant 0 : i32
    return %c0_i32, %c0_i32_0 : i32, i32
  }
  func.func @transform_6(%arg0: i32) -> (i32, i32) {
    %c0_i32 = arith.constant 0 : i32
    %c0_i32_0 = arith.constant 0 : i32
    %c0_i32_1 = arith.constant 0 : i32
    return %c0_i32, %c0_i32_0 : i32, i32
  }
  func.func @transform_7(%arg0: i32) -> (i32, i32) {
    %c0_i32 = arith.constant 0 : i32
    %c0_i32_0 = arith.constant 0 : i32
    %c0_i32_1 = arith.constant 0 : i32
    return %c0_i32, %c0_i32_0 : i32, i32
  }
  func.func @transform_8(%arg0: i32) -> (i32, i32) {
    %c0_i32 = arith.constant 0 : i32
    %c0_i32_0 = arith.constant 0 : i32
    %c0_i32_1 = arith.constant 0 : i32
    return %c0_i32, %c0_i32_0 : i32, i32
  }
  func.func @transform_9(%arg0: i32) -> (i32, i32) {
    %c0_i32 = arith.constant 0 : i32
    %c0_i32_0 = arith.constant 0 : i32
    return %arg0, %c0_i32 : i32, i32
  }
}

module attributes {stable_mosaic.version = 11 : i64} {
  func.func @kernel(%arg0: i32, %arg1: i32, %arg2: memref<8x12xf32, #tpu.memory_space<vmem>>, %arg3: memref<12x32xf32, #tpu.memory_space<vmem>>, %arg4: memref<32x16xf32, #tpu.memory_space<vmem>>, %arg5: memref<16x8xf32, #tpu.memory_space<vmem>>, %arg6: memref<8x1xf32, #tpu.memory_space<vmem>>, %arg7: memref<24x128xf32, #tpu.memory_space<vmem>>, %arg8: memref<8x128xf32, #tpu.memory_space<vmem>>, %arg9: memref<8x128xf32, #tpu.memory_space<vmem>>) attributes {dimension_semantics = [#tpu.dimension_semantics<arbitrary>, #tpu.dimension_semantics<arbitrary>], iteration_bounds = array<i64: 4, 1>, scalar_prefetch = 0 : i64, scratch_operands = 1 : i64, tpu.core_type = #tpu.core_type<tc>, window_params = [{transform_indices = @transform_0, window_bounds = array<i64: 8, 12>}, {pipeline_mode = #tpu.pipeline_mode<synchronous>, transform_indices = @transform_1, window_bounds = array<i64: 12, 32>}, {pipeline_mode = #tpu.pipeline_mode<synchronous>, transform_indices = @transform_2, window_bounds = array<i64: 32, 16>}, {pipeline_mode = #tpu.pipeline_mode<synchronous>, transform_indices = @transform_3, window_bounds = array<i64: 16, 8>}, {pipeline_mode = #tpu.pipeline_mode<synchronous>, transform_indices = @transform_4, window_bounds = array<i64: 8, 1>}, {pipeline_mode = #tpu.pipeline_mode<synchronous>, transform_indices = @transform_5, window_bounds = array<i64: 24, 128>}, {pipeline_mode = #tpu.pipeline_mode<synchronous>, transform_indices = @transform_6, window_bounds = array<i64: 8, 128>}]} {
    %c0_i32 = arith.constant 0 : i32
    %0 = arith.cmpi eq, %arg0, %c0_i32 : i32
    %c0_i32_0 = arith.constant 0 : i32
    %1 = arith.cmpi eq, %arg1, %c0_i32_0 : i32
    %2 = arith.andi %0, %1 : i1
    %3 = arith.extui %2 : i1 to i32
    %c0_i32_1 = arith.constant 0 : i32
    %4 = arith.cmpi ne, %3, %c0_i32_1 : i32
    scf.if %4 {
      %cst_44 = arith.constant 0.000000e+00 : f32
      %109 = vector.broadcast %cst_44 : f32 to vector<8x128xf32>
      %c0_45 = arith.constant 0 : index
      %c0_46 = arith.constant 0 : index
      %110 = vector.load %arg9[%c0_45, %c0_46] : memref<8x128xf32, #tpu.memory_space<vmem>>, vector<8x128xf32>
      tpu.vector_store %arg9[%c0_45, %c0_46], %109 {strides = array<i32>} : memref<8x128xf32, #tpu.memory_space<vmem>>, vector<8x128xf32>,
      %cst_47 = arith.constant 0.000000e+00 : f32
      %111 = vector.broadcast %cst_47 : f32 to vector<4x128xf32>
      %c0_48 = arith.constant 0 : index
      %c0_49 = arith.constant 0 : index
      %112 = vector.load %arg8[%c0_48, %c0_49] : memref<8x128xf32, #tpu.memory_space<vmem>>, vector<4x128xf32>
      tpu.vector_store %arg8[%c0_48, %c0_49], %111 {strides = array<i32>} : memref<8x128xf32, #tpu.memory_space<vmem>>, vector<4x128xf32>,
      %cst_50 = arith.constant 1.000000e+00 : f32
      %113 = vector.broadcast %cst_50 : f32 to vector<4x128xf32>
      %c4_51 = arith.constant 4 : index
      %c0_52 = arith.constant 0 : index
      %114 = vector.load %arg8[%c4_51, %c0_52] : memref<8x128xf32, #tpu.memory_space<vmem>>, vector<4x128xf32>
      tpu.vector_store %arg8[%c4_51, %c0_52], %113 {strides = array<i32>} : memref<8x128xf32, #tpu.memory_space<vmem>>, vector<4x128xf32>,
    } else {
    }
    %c0 = arith.constant 0 : index
    %c0_2 = arith.constant 0 : index
    %5 = vector.load %arg2[%c0, %c0_2] : memref<8x12xf32, #tpu.memory_space<vmem>>, vector<8x12xf32>
    %c0_3 = arith.constant 0 : index
    %c0_4 = arith.constant 0 : index
    %6 = vector.load %arg7[%c0_3, %c0_4] : memref<24x128xf32, #tpu.memory_space<vmem>>, vector<24x128xf32>
    %c0_5 = arith.constant 0 : index
    %c0_6 = arith.constant 0 : index
    %7 = vector.load %arg3[%c0_5, %c0_6] : memref<12x32xf32, #tpu.memory_space<vmem>>, vector<12x32xf32>
    %c0_7 = arith.constant 0 : index
    %c0_8 = arith.constant 0 : index
    %8 = vector.load %arg4[%c0_7, %c0_8] : memref<32x16xf32, #tpu.memory_space<vmem>>, vector<32x16xf32>
    %c0_9 = arith.constant 0 : index
    %c0_10 = arith.constant 0 : index
    %9 = vector.load %arg5[%c0_9, %c0_10] : memref<16x8xf32, #tpu.memory_space<vmem>>, vector<16x8xf32>
    %c0_11 = arith.constant 0 : index
    %c0_12 = arith.constant 0 : index
    %10 = vector.load %arg6[%c0_11, %c0_12] : memref<8x1xf32, #tpu.memory_space<vmem>>, vector<8x1xf32>
    %11 = tpu.iota {dimensions = array<i32: 0>} : vector<8x1xi32>
    %c8_i32 = arith.constant 8 : i32
    %12 = arith.muli %arg1, %c8_i32 : i32
    %13 = vector.broadcast %12 : i32 to vector<8x1xi32>
    %14 = arith.addi %11, %13 : vector<8x1xi32>
    %c8_i32_13 = arith.constant 8 : i32
    %15 = vector.broadcast %c8_i32_13 : i32 to vector<8x1xi32>
    %16 = arith.cmpi slt, %14, %15 : vector<8x1xi32>
    %17 = arith.extui %16 : vector<8x1xi1> to vector<8x1xi32>
    %18 = arith.sitofp %17 : vector<8x1xi32> to vector<8x1xf32>
    %19 = vector.extract_strided_slice %6 {offsets = [0, 0], sizes = [1, 32], strides = [1, 1]} : vector<24x128xf32> to vector<1x32xf32>
    %cst = arith.constant dense<0.000000e+00> : vector<8x32xf32>
    %20 = tpu.matmul %5, %7, %cst {dimension_numbers = #tpu.dot_dimension_numbers<[1], [0], [0], [1], [0, 0, 1, 1], [], []>} : vector<8x12xf32>, vector<12x32xf32>, vector<8x32xf32> -> vector<8x32xf32>
    %21 = vector.broadcast %19 : vector<1x32xf32> to vector<8x32xf32>
    %22 = arith.addf %20, %21 : vector<8x32xf32>
    %c0_i32_14 = arith.constant 0 : i32
    %23 = arith.cmpi eq, %arg0, %c0_i32_14 : i32
    %24 = arith.extui %23 : i1 to i32
    %c0_i32_15 = arith.constant 0 : i32
    %25 = arith.cmpi ne, %24, %c0_i32_15 : i32
    scf.if %25 {
      %109 = vector.broadcast %18 : vector<8x1xf32> to vector<8x32xf32>
      %110 = arith.mulf %109, %22 : vector<8x32xf32>
      %c0_44 = arith.constant 0 : index
      %c0_45 = arith.constant 0 : index
      %111 = vector.load %arg9[%c0_44, %c0_45] : memref<8x128xf32, #tpu.memory_space<vmem>>, vector<1x32xf32>
      %cst_46 = arith.constant dense<0.000000e+00> : vector<32xf32>
      %112 = vector.multi_reduction <add>, %110, %cst_46 [0] : vector<8x32xf32> to vector<32xf32>
      %113 = vector.shape_cast %112 : vector<32xf32> to vector<1x32xf32>
      %114 = arith.addf %111, %113 : vector<1x32xf32>
      %c0_47 = arith.constant 0 : index
      %c0_48 = arith.constant 0 : index
      %115 = vector.load %arg9[%c0_47, %c0_48] : memref<8x128xf32, #tpu.memory_space<vmem>>, vector<1x32xf32>
      tpu.vector_store %arg9[%c0_47, %c0_48], %114 {strides = array<i32>} : memref<8x128xf32, #tpu.memory_space<vmem>>, vector<1x32xf32>,
      %c4_49 = arith.constant 4 : index
      %c0_50 = arith.constant 0 : index
      %116 = vector.load %arg9[%c4_49, %c0_50] : memref<8x128xf32, #tpu.memory_space<vmem>>, vector<1x32xf32>
      %117 = arith.mulf %110, %22 : vector<8x32xf32>
      %cst_51 = arith.constant dense<0.000000e+00> : vector<32xf32>
      %118 = vector.multi_reduction <add>, %117, %cst_51 [0] : vector<8x32xf32> to vector<32xf32>
      %119 = vector.shape_cast %118 : vector<32xf32> to vector<1x32xf32>
      %120 = arith.addf %116, %119 : vector<1x32xf32>
      %c4_52 = arith.constant 4 : index
      %c0_53 = arith.constant 0 : index
      %121 = vector.load %arg9[%c4_52, %c0_53] : memref<8x128xf32, #tpu.memory_space<vmem>>, vector<1x32xf32>
      tpu.vector_store %arg9[%c4_52, %c0_53], %120 {strides = array<i32>} : memref<8x128xf32, #tpu.memory_space<vmem>>, vector<1x32xf32>,
    } else {
    }
    %c0_i32_16 = arith.constant 0 : i32
    %26 = arith.cmpi eq, %arg0, %c0_i32_16 : i32
    %c0_i32_17 = arith.constant 0 : i32
    %27 = arith.cmpi eq, %arg1, %c0_i32_17 : i32
    %28 = arith.andi %26, %27 : i1
    %29 = arith.extui %28 : i1 to i32
    %c0_i32_18 = arith.constant 0 : i32
    %30 = arith.cmpi ne, %29, %c0_i32_18 : i32
    scf.if %30 {
      %c0_44 = arith.constant 0 : index
      %c0_45 = arith.constant 0 : index
      %109 = vector.load %arg9[%c0_44, %c0_45] : memref<8x128xf32, #tpu.memory_space<vmem>>, vector<1x32xf32>
      %cst_46 = arith.constant 1.250000e-01 : f32
      %110 = vector.broadcast %cst_46 : f32 to vector<1x32xf32>
      %111 = arith.mulf %109, %110 : vector<1x32xf32>
      %c4_47 = arith.constant 4 : index
      %c0_48 = arith.constant 0 : index
      %112 = vector.load %arg9[%c4_47, %c0_48] : memref<8x128xf32, #tpu.memory_space<vmem>>, vector<1x32xf32>
      %cst_49 = arith.constant 1.250000e-01 : f32
      %113 = vector.broadcast %cst_49 : f32 to vector<1x32xf32>
      %114 = arith.mulf %112, %113 : vector<1x32xf32>
      %115 = arith.mulf %111, %111 : vector<1x32xf32>
      %116 = arith.subf %114, %115 : vector<1x32xf32>
      %cst_50 = arith.constant 0.000000e+00 : f32
      %117 = vector.broadcast %cst_50 : f32 to vector<1x32xf32>
      %118 = arith.maximumf %116, %117 : vector<1x32xf32>
      %c0_51 = arith.constant 0 : index
      %c0_52 = arith.constant 0 : index
      %119 = vector.load %arg8[%c0_51, %c0_52] : memref<8x128xf32, #tpu.memory_space<vmem>>, vector<1x32xf32>
      tpu.vector_store %arg8[%c0_51, %c0_52], %111 {strides = array<i32>} : memref<8x128xf32, #tpu.memory_space<vmem>>, vector<1x32xf32>,
      %cst_53 = arith.constant 9.99999974E-6 : f32
      %120 = vector.broadcast %cst_53 : f32 to vector<1x32xf32>
      %121 = arith.addf %118, %120 : vector<1x32xf32>
      %122 = math.rsqrt %121 : vector<1x32xf32>
      %c4_54 = arith.constant 4 : index
      %c0_55 = arith.constant 0 : index
      %123 = vector.load %arg8[%c4_54, %c0_55] : memref<8x128xf32, #tpu.memory_space<vmem>>, vector<1x32xf32>
      tpu.vector_store %arg8[%c4_54, %c0_55], %122 {strides = array<i32>} : memref<8x128xf32, #tpu.memory_space<vmem>>, vector<1x32xf32>,
    } else {
    }
    %c0_19 = arith.constant 0 : index
    %c0_20 = arith.constant 0 : index
    %31 = vector.load %arg8[%c0_19, %c0_20] : memref<8x128xf32, #tpu.memory_space<vmem>>, vector<1x32xf32>
    %c4 = arith.constant 4 : index
    %c0_21 = arith.constant 0 : index
    %32 = vector.load %arg8[%c4, %c0_21] : memref<8x128xf32, #tpu.memory_space<vmem>>, vector<1x32xf32>
    %33 = vector.extract_strided_slice %6 {offsets = [2, 0], sizes = [1, 32], strides = [1, 1]} : vector<24x128xf32> to vector<1x32xf32>
    %34 = vector.extract_strided_slice %6 {offsets = [3, 0], sizes = [1, 32], strides = [1, 1]} : vector<24x128xf32> to vector<1x32xf32>
    %35 = vector.broadcast %31 : vector<1x32xf32> to vector<8x32xf32>
    %36 = arith.subf %22, %35 : vector<8x32xf32>
    %37 = vector.broadcast %32 : vector<1x32xf32> to vector<8x32xf32>
    %38 = arith.mulf %36, %37 : vector<8x32xf32>
    %39 = vector.broadcast %33 : vector<1x32xf32> to vector<8x32xf32>
    %40 = arith.mulf %38, %39 : vector<8x32xf32>
    %41 = vector.broadcast %34 : vector<1x32xf32> to vector<8x32xf32>
    %42 = arith.addf %40, %41 : vector<8x32xf32>
    %cst_22 = arith.constant 0.000000e+00 : f32
    %43 = vector.broadcast %cst_22 : f32 to vector<8x32xf32>
    %44 = arith.maximumf %42, %43 : vector<8x32xf32>
    %45 = vector.extract_strided_slice %6 {offsets = [4, 0], sizes = [1, 16], strides = [1, 1]} : vector<24x128xf32> to vector<1x16xf32>
    %cst_23 = arith.constant dense<0.000000e+00> : vector<8x16xf32>
    %46 = tpu.matmul %44, %8, %cst_23 {dimension_numbers = #tpu.dot_dimension_numbers<[1], [0], [0], [1], [0, 0, 1, 1], [], []>} : vector<8x32xf32>, vector<32x16xf32>, vector<8x16xf32> -> vector<8x16xf32>
    %47 = vector.broadcast %45 : vector<1x16xf32> to vector<8x16xf32>
    %48 = arith.addf %46, %47 : vector<8x16xf32>
    %c1_i32 = arith.constant 1 : i32
    %49 = arith.cmpi eq, %arg0, %c1_i32 : i32
    %50 = arith.extui %49 : i1 to i32
    %c0_i32_24 = arith.constant 0 : i32
    %51 = arith.cmpi ne, %50, %c0_i32_24 : i32
    scf.if %51 {
      %109 = vector.broadcast %18 : vector<8x1xf32> to vector<8x16xf32>
      %110 = arith.mulf %109, %48 : vector<8x16xf32>
      %c1_44 = arith.constant 1 : index
      %c0_45 = arith.constant 0 : index
      %111 = vector.load %arg9[%c1_44, %c0_45] : memref<8x128xf32, #tpu.memory_space<vmem>>, vector<1x16xf32>
      %cst_46 = arith.constant dense<0.000000e+00> : vector<16xf32>
      %112 = vector.multi_reduction <add>, %110, %cst_46 [0] : vector<8x16xf32> to vector<16xf32>
      %113 = vector.shape_cast %112 : vector<16xf32> to vector<1x16xf32>
      %114 = arith.addf %111, %113 : vector<1x16xf32>
      %c1_47 = arith.constant 1 : index
      %c0_48 = arith.constant 0 : index
      %115 = vector.load %arg9[%c1_47, %c0_48] : memref<8x128xf32, #tpu.memory_space<vmem>>, vector<1x16xf32>
      tpu.vector_store %arg9[%c1_47, %c0_48], %114 {strides = array<i32>} : memref<8x128xf32, #tpu.memory_space<vmem>>, vector<1x16xf32>,
      %c5_49 = arith.constant 5 : index
      %c0_50 = arith.constant 0 : index
      %116 = vector.load %arg9[%c5_49, %c0_50] : memref<8x128xf32, #tpu.memory_space<vmem>>, vector<1x16xf32>
      %117 = arith.mulf %110, %48 : vector<8x16xf32>
      %cst_51 = arith.constant dense<0.000000e+00> : vector<16xf32>
      %118 = vector.multi_reduction <add>, %117, %cst_51 [0] : vector<8x16xf32> to vector<16xf32>
      %119 = vector.shape_cast %118 : vector<16xf32> to vector<1x16xf32>
      %120 = arith.addf %116, %119 : vector<1x16xf32>
      %c5_52 = arith.constant 5 : index
      %c0_53 = arith.constant 0 : index
      %121 = vector.load %arg9[%c5_52, %c0_53] : memref<8x128xf32, #tpu.memory_space<vmem>>, vector<1x16xf32>
      tpu.vector_store %arg9[%c5_52, %c0_53], %120 {strides = array<i32>} : memref<8x128xf32, #tpu.memory_space<vmem>>, vector<1x16xf32>,
    } else {
    }
    %c1_i32_25 = arith.constant 1 : i32
    %52 = arith.cmpi eq, %arg0, %c1_i32_25 : i32
    %c0_i32_26 = arith.constant 0 : i32
    %53 = arith.cmpi eq, %arg1, %c0_i32_26 : i32
    %54 = arith.andi %52, %53 : i1
    %55 = arith.extui %54 : i1 to i32
    %c0_i32_27 = arith.constant 0 : i32
    %56 = arith.cmpi ne, %55, %c0_i32_27 : i32
    scf.if %56 {
      %c1_44 = arith.constant 1 : index
      %c0_45 = arith.constant 0 : index
      %109 = vector.load %arg9[%c1_44, %c0_45] : memref<8x128xf32, #tpu.memory_space<vmem>>, vector<1x16xf32>
      %cst_46 = arith.constant 1.250000e-01 : f32
      %110 = vector.broadcast %cst_46 : f32 to vector<1x16xf32>
      %111 = arith.mulf %109, %110 : vector<1x16xf32>
      %c5_47 = arith.constant 5 : index
      %c0_48 = arith.constant 0 : index
      %112 = vector.load %arg9[%c5_47, %c0_48] : memref<8x128xf32, #tpu.memory_space<vmem>>, vector<1x16xf32>
      %cst_49 = arith.constant 1.250000e-01 : f32
      %113 = vector.broadcast %cst_49 : f32 to vector<1x16xf32>
      %114 = arith.mulf %112, %113 : vector<1x16xf32>
      %115 = arith.mulf %111, %111 : vector<1x16xf32>
      %116 = arith.subf %114, %115 : vector<1x16xf32>
      %cst_50 = arith.constant 0.000000e+00 : f32
      %117 = vector.broadcast %cst_50 : f32 to vector<1x16xf32>
      %118 = arith.maximumf %116, %117 : vector<1x16xf32>
      %c1_51 = arith.constant 1 : index
      %c0_52 = arith.constant 0 : index
      %119 = vector.load %arg8[%c1_51, %c0_52] : memref<8x128xf32, #tpu.memory_space<vmem>>, vector<1x16xf32>
      tpu.vector_store %arg8[%c1_51, %c0_52], %111 {strides = array<i32>} : memref<8x128xf32, #tpu.memory_space<vmem>>, vector<1x16xf32>,
      %cst_53 = arith.constant 9.99999974E-6 : f32
      %120 = vector.broadcast %cst_53 : f32 to vector<1x16xf32>
      %121 = arith.addf %118, %120 : vector<1x16xf32>
      %122 = math.rsqrt %121 : vector<1x16xf32>
      %c5_54 = arith.constant 5 : index
      %c0_55 = arith.constant 0 : index
      %123 = vector.load %arg8[%c5_54, %c0_55] : memref<8x128xf32, #tpu.memory_space<vmem>>, vector<1x16xf32>
      tpu.vector_store %arg8[%c5_54, %c0_55], %122 {strides = array<i32>} : memref<8x128xf32, #tpu.memory_space<vmem>>, vector<1x16xf32>,
    } else {
    }
    %c1 = arith.constant 1 : index
    %c0_28 = arith.constant 0 : index
    %57 = vector.load %arg8[%c1, %c0_28] : memref<8x128xf32, #tpu.memory_space<vmem>>, vector<1x16xf32>
    %c5 = arith.constant 5 : index
    %c0_29 = arith.constant 0 : index
    %58 = vector.load %arg8[%c5, %c0_29] : memref<8x128xf32, #tpu.memory_space<vmem>>, vector<1x16xf32>
    %59 = vector.extract_strided_slice %6 {offsets = [6, 0], sizes = [1, 16], strides = [1, 1]} : vector<24x128xf32> to vector<1x16xf32>
    %60 = vector.extract_strided_slice %6 {offsets = [7, 0], sizes = [1, 16], strides = [1, 1]} : vector<24x128xf32> to vector<1x16xf32>
    %61 = vector.broadcast %57 : vector<1x16xf32> to vector<8x16xf32>
    %62 = arith.subf %48, %61 : vector<8x16xf32>
    %63 = vector.broadcast %58 : vector<1x16xf32> to vector<8x16xf32>
    %64 = arith.mulf %62, %63 : vector<8x16xf32>
    %65 = vector.broadcast %59 : vector<1x16xf32> to vector<8x16xf32>
    %66 = arith.mulf %64, %65 : vector<8x16xf32>
    %67 = vector.broadcast %60 : vector<1x16xf32> to vector<8x16xf32>
    %68 = arith.addf %66, %67 : vector<8x16xf32>
    %cst_30 = arith.constant 0.000000e+00 : f32
    %69 = vector.broadcast %cst_30 : f32 to vector<8x16xf32>
    %70 = arith.maximumf %68, %69 : vector<8x16xf32>
    %71 = vector.extract_strided_slice %6 {offsets = [8, 0], sizes = [1, 8], strides = [1, 1]} : vector<24x128xf32> to vector<1x8xf32>
    %cst_31 = arith.constant dense<0.000000e+00> : vector<8x8xf32>
    %72 = tpu.matmul %70, %9, %cst_31 {dimension_numbers = #tpu.dot_dimension_numbers<[1], [0], [0], [1], [0, 0, 1, 1], [], []>} : vector<8x16xf32>, vector<16x8xf32>, vector<8x8xf32> -> vector<8x8xf32>
    %73 = vector.broadcast %71 : vector<1x8xf32> to vector<8x8xf32>
    %74 = arith.addf %72, %73 : vector<8x8xf32>
    %c2_i32 = arith.constant 2 : i32
    %75 = arith.cmpi eq, %arg0, %c2_i32 : i32
    %76 = arith.extui %75 : i1 to i32
    %c0_i32_32 = arith.constant 0 : i32
    %77 = arith.cmpi ne, %76, %c0_i32_32 : i32
    scf.if %77 {
      %109 = vector.broadcast %18 : vector<8x1xf32> to vector<8x8xf32>
      %110 = arith.mulf %109, %74 : vector<8x8xf32>
      %c2_44 = arith.constant 2 : index
      %c0_45 = arith.constant 0 : index
      %111 = vector.load %arg9[%c2_44, %c0_45] : memref<8x128xf32, #tpu.memory_space<vmem>>, vector<1x8xf32>
      %cst_46 = arith.constant dense<0.000000e+00> : vector<8xf32>
      %112 = vector.multi_reduction <add>, %110, %cst_46 [0] : vector<8x8xf32> to vector<8xf32>
      %113 = vector.shape_cast %112 : vector<8xf32> to vector<1x8xf32>
      %114 = arith.addf %111, %113 : vector<1x8xf32>
      %c2_47 = arith.constant 2 : index
      %c0_48 = arith.constant 0 : index
      %115 = vector.load %arg9[%c2_47, %c0_48] : memref<8x128xf32, #tpu.memory_space<vmem>>, vector<1x8xf32>
      tpu.vector_store %arg9[%c2_47, %c0_48], %114 {strides = array<i32>} : memref<8x128xf32, #tpu.memory_space<vmem>>, vector<1x8xf32>,
      %c6_49 = arith.constant 6 : index
      %c0_50 = arith.constant 0 : index
      %116 = vector.load %arg9[%c6_49, %c0_50] : memref<8x128xf32, #tpu.memory_space<vmem>>, vector<1x8xf32>
      %117 = arith.mulf %110, %74 : vector<8x8xf32>
      %cst_51 = arith.constant dense<0.000000e+00> : vector<8xf32>
      %118 = vector.multi_reduction <add>, %117, %cst_51 [0] : vector<8x8xf32> to vector<8xf32>
      %119 = vector.shape_cast %118 : vector<8xf32> to vector<1x8xf32>
      %120 = arith.addf %116, %119 : vector<1x8xf32>
      %c6_52 = arith.constant 6 : index
      %c0_53 = arith.constant 0 : index
      %121 = vector.load %arg9[%c6_52, %c0_53] : memref<8x128xf32, #tpu.memory_space<vmem>>, vector<1x8xf32>
      tpu.vector_store %arg9[%c6_52, %c0_53], %120 {strides = array<i32>} : memref<8x128xf32, #tpu.memory_space<vmem>>, vector<1x8xf32>,
    } else {
    }
    %c2_i32_33 = arith.constant 2 : i32
    %78 = arith.cmpi eq, %arg0, %c2_i32_33 : i32
    %c0_i32_34 = arith.constant 0 : i32
    %79 = arith.cmpi eq, %arg1, %c0_i32_34 : i32
    %80 = arith.andi %78, %79 : i1
    %81 = arith.extui %80 : i1 to i32
    %c0_i32_35 = arith.constant 0 : i32
    %82 = arith.cmpi ne, %81, %c0_i32_35 : i32
    scf.if %82 {
      %c2_44 = arith.constant 2 : index
      %c0_45 = arith.constant 0 : index
      %109 = vector.load %arg9[%c2_44, %c0_45] : memref<8x128xf32, #tpu.memory_space<vmem>>, vector<1x8xf32>
      %cst_46 = arith.constant 1.250000e-01 : f32
      %110 = vector.broadcast %cst_46 : f32 to vector<1x8xf32>
      %111 = arith.mulf %109, %110 : vector<1x8xf32>
      %c6_47 = arith.constant 6 : index
      %c0_48 = arith.constant 0 : index
      %112 = vector.load %arg9[%c6_47, %c0_48] : memref<8x128xf32, #tpu.memory_space<vmem>>, vector<1x8xf32>
      %cst_49 = arith.constant 1.250000e-01 : f32
      %113 = vector.broadcast %cst_49 : f32 to vector<1x8xf32>
      %114 = arith.mulf %112, %113 : vector<1x8xf32>
      %115 = arith.mulf %111, %111 : vector<1x8xf32>
      %116 = arith.subf %114, %115 : vector<1x8xf32>
      %cst_50 = arith.constant 0.000000e+00 : f32
      %117 = vector.broadcast %cst_50 : f32 to vector<1x8xf32>
      %118 = arith.maximumf %116, %117 : vector<1x8xf32>
      %c2_51 = arith.constant 2 : index
      %c0_52 = arith.constant 0 : index
      %119 = vector.load %arg8[%c2_51, %c0_52] : memref<8x128xf32, #tpu.memory_space<vmem>>, vector<1x8xf32>
      tpu.vector_store %arg8[%c2_51, %c0_52], %111 {strides = array<i32>} : memref<8x128xf32, #tpu.memory_space<vmem>>, vector<1x8xf32>,
      %cst_53 = arith.constant 9.99999974E-6 : f32
      %120 = vector.broadcast %cst_53 : f32 to vector<1x8xf32>
      %121 = arith.addf %118, %120 : vector<1x8xf32>
      %122 = math.rsqrt %121 : vector<1x8xf32>
      %c6_54 = arith.constant 6 : index
      %c0_55 = arith.constant 0 : index
      %123 = vector.load %arg8[%c6_54, %c0_55] : memref<8x128xf32, #tpu.memory_space<vmem>>, vector<1x8xf32>
      tpu.vector_store %arg8[%c6_54, %c0_55], %122 {strides = array<i32>} : memref<8x128xf32, #tpu.memory_space<vmem>>, vector<1x8xf32>,
    } else {
    }
    %c2 = arith.constant 2 : index
    %c0_36 = arith.constant 0 : index
    %83 = vector.load %arg8[%c2, %c0_36] : memref<8x128xf32, #tpu.memory_space<vmem>>, vector<1x8xf32>
    %c6 = arith.constant 6 : index
    %c0_37 = arith.constant 0 : index
    %84 = vector.load %arg8[%c6, %c0_37] : memref<8x128xf32, #tpu.memory_space<vmem>>, vector<1x8xf32>
    %85 = vector.extract_strided_slice %6 {offsets = [10, 0], sizes = [1, 8], strides = [1, 1]} : vector<24x128xf32> to vector<1x8xf32>
    %86 = vector.extract_strided_slice %6 {offsets = [11, 0], sizes = [1, 8], strides = [1, 1]} : vector<24x128xf32> to vector<1x8xf32>
    %87 = vector.broadcast %83 : vector<1x8xf32> to vector<8x8xf32>
    %88 = arith.subf %74, %87 : vector<8x8xf32>
    %89 = vector.broadcast %84 : vector<1x8xf32> to vector<8x8xf32>
    %90 = arith.mulf %88, %89 : vector<8x8xf32>
    %91 = vector.broadcast %85 : vector<1x8xf32> to vector<8x8xf32>
    %92 = arith.mulf %90, %91 : vector<8x8xf32>
    %93 = vector.broadcast %86 : vector<1x8xf32> to vector<8x8xf32>
    %94 = arith.addf %92, %93 : vector<8x8xf32>
    %cst_38 = arith.constant 0.000000e+00 : f32
    %95 = vector.broadcast %cst_38 : f32 to vector<8x8xf32>
    %96 = arith.maximumf %94, %95 : vector<8x8xf32>
    %97 = vector.extract_strided_slice %6 {offsets = [12, 0], sizes = [1, 1], strides = [1, 1]} : vector<24x128xf32> to vector<1x1xf32>
    %cst_39 = arith.constant dense<0.000000e+00> : vector<8x1xf32>
    %98 = tpu.matmul %96, %10, %cst_39 {dimension_numbers = #tpu.dot_dimension_numbers<[1], [0], [0], [1], [0, 0, 1, 1], [], []>} : vector<8x8xf32>, vector<8x1xf32>, vector<8x1xf32> -> vector<8x1xf32>
    %99 = vector.broadcast %97 : vector<1x1xf32> to vector<8x1xf32>
    %100 = arith.addf %98, %99 : vector<8x1xf32>
    %c3_i32 = arith.constant 3 : i32
    %101 = arith.cmpi eq, %arg0, %c3_i32 : i32
    %102 = arith.extui %101 : i1 to i32
    %c0_i32_40 = arith.constant 0 : i32
    %103 = arith.cmpi ne, %102, %c0_i32_40 : i32
    scf.if %103 {
      %109 = arith.mulf %18, %100 : vector<8x1xf32>
      %c3 = arith.constant 3 : index
      %c0_44 = arith.constant 0 : index
      %110 = vector.load %arg9[%c3, %c0_44] : memref<8x128xf32, #tpu.memory_space<vmem>>, vector<1x1xf32>
      %cst_45 = arith.constant dense<0.000000e+00> : vector<1xf32>
      %111 = vector.multi_reduction <add>, %109, %cst_45 [0] : vector<8x1xf32> to vector<1xf32>
      %112 = vector.shape_cast %111 : vector<1xf32> to vector<1x1xf32>
      %113 = arith.addf %110, %112 : vector<1x1xf32>
      %c3_46 = arith.constant 3 : index
      %c0_47 = arith.constant 0 : index
      %114 = vector.load %arg9[%c3_46, %c0_47] : memref<8x128xf32, #tpu.memory_space<vmem>>, vector<1x1xf32>
      tpu.vector_store %arg9[%c3_46, %c0_47], %113 {strides = array<i32>} : memref<8x128xf32, #tpu.memory_space<vmem>>, vector<1x1xf32>,
      %c7 = arith.constant 7 : index
      %c0_48 = arith.constant 0 : index
      %115 = vector.load %arg9[%c7, %c0_48] : memref<8x128xf32, #tpu.memory_space<vmem>>, vector<1x1xf32>
      %116 = arith.mulf %109, %100 : vector<8x1xf32>
      %cst_49 = arith.constant dense<0.000000e+00> : vector<1xf32>
      %117 = vector.multi_reduction <add>, %116, %cst_49 [0] : vector<8x1xf32> to vector<1xf32>
      %118 = vector.shape_cast %117 : vector<1xf32> to vector<1x1xf32>
      %119 = arith.addf %115, %118 : vector<1x1xf32>
      %c7_50 = arith.constant 7 : index
      %c0_51 = arith.constant 0 : index
      %120 = vector.load %arg9[%c7_50, %c0_51] : memref<8x128xf32, #tpu.memory_space<vmem>>, vector<1x1xf32>
      tpu.vector_store %arg9[%c7_50, %c0_51], %119 {strides = array<i32>} : memref<8x128xf32, #tpu.memory_space<vmem>>, vector<1x1xf32>,
    } else {
    }
    %c3_i32_41 = arith.constant 3 : i32
    %104 = arith.cmpi eq, %arg0, %c3_i32_41 : i32
    %c0_i32_42 = arith.constant 0 : i32
    %105 = arith.cmpi eq, %arg1, %c0_i32_42 : i32
    %106 = arith.andi %104, %105 : i1
    %107 = arith.extui %106 : i1 to i32
    %c0_i32_43 = arith.constant 0 : i32
    %108 = arith.cmpi ne, %107, %c0_i32_43 : i32
    scf.if %108 {
      %c3 = arith.constant 3 : index
      %c0_44 = arith.constant 0 : index
      %109 = vector.load %arg9[%c3, %c0_44] : memref<8x128xf32, #tpu.memory_space<vmem>>, vector<1x1xf32>
      %cst_45 = arith.constant 1.250000e-01 : f32
      %110 = vector.broadcast %cst_45 : f32 to vector<1x1xf32>
      %111 = arith.mulf %109, %110 : vector<1x1xf32>
      %c7 = arith.constant 7 : index
      %c0_46 = arith.constant 0 : index
      %112 = vector.load %arg9[%c7, %c0_46] : memref<8x128xf32, #tpu.memory_space<vmem>>, vector<1x1xf32>
      %cst_47 = arith.constant 1.250000e-01 : f32
      %113 = vector.broadcast %cst_47 : f32 to vector<1x1xf32>
      %114 = arith.mulf %112, %113 : vector<1x1xf32>
      %115 = arith.mulf %111, %111 : vector<1x1xf32>
      %116 = arith.subf %114, %115 : vector<1x1xf32>
      %cst_48 = arith.constant 0.000000e+00 : f32
      %117 = vector.broadcast %cst_48 : f32 to vector<1x1xf32>
      %118 = arith.maximumf %116, %117 : vector<1x1xf32>
      %c3_49 = arith.constant 3 : index
      %c0_50 = arith.constant 0 : index
      %119 = vector.load %arg8[%c3_49, %c0_50] : memref<8x128xf32, #tpu.memory_space<vmem>>, vector<1x1xf32>
      tpu.vector_store %arg8[%c3_49, %c0_50], %111 {strides = array<i32>} : memref<8x128xf32, #tpu.memory_space<vmem>>, vector<1x1xf32>,
      %cst_51 = arith.constant 9.99999974E-6 : f32
      %120 = vector.broadcast %cst_51 : f32 to vector<1x1xf32>
      %121 = arith.addf %118, %120 : vector<1x1xf32>
      %122 = math.rsqrt %121 : vector<1x1xf32>
      %c7_52 = arith.constant 7 : index
      %c0_53 = arith.constant 0 : index
      %123 = vector.load %arg8[%c7_52, %c0_53] : memref<8x128xf32, #tpu.memory_space<vmem>>, vector<1x1xf32>
      tpu.vector_store %arg8[%c7_52, %c0_53], %122 {strides = array<i32>} : memref<8x128xf32, #tpu.memory_space<vmem>>, vector<1x1xf32>,
    } else {
    }
    return
  }
  func.func @transform_0(%arg0: i32, %arg1: i32) -> (i32, i32) {
    %c0_i32 = arith.constant 0 : i32
    %c0_i32_0 = arith.constant 0 : i32
    return %arg1, %c0_i32 : i32, i32
  }
  func.func @transform_1(%arg0: i32, %arg1: i32) -> (i32, i32) {
    %c0_i32 = arith.constant 0 : i32
    %c0_i32_0 = arith.constant 0 : i32
    %c0_i32_1 = arith.constant 0 : i32
    return %c0_i32, %c0_i32_0 : i32, i32
  }
  func.func @transform_2(%arg0: i32, %arg1: i32) -> (i32, i32) {
    %c0_i32 = arith.constant 0 : i32
    %c0_i32_0 = arith.constant 0 : i32
    %c0_i32_1 = arith.constant 0 : i32
    return %c0_i32, %c0_i32_0 : i32, i32
  }
  func.func @transform_3(%arg0: i32, %arg1: i32) -> (i32, i32) {
    %c0_i32 = arith.constant 0 : i32
    %c0_i32_0 = arith.constant 0 : i32
    %c0_i32_1 = arith.constant 0 : i32
    return %c0_i32, %c0_i32_0 : i32, i32
  }
  func.func @transform_4(%arg0: i32, %arg1: i32) -> (i32, i32) {
    %c0_i32 = arith.constant 0 : i32
    %c0_i32_0 = arith.constant 0 : i32
    %c0_i32_1 = arith.constant 0 : i32
    return %c0_i32, %c0_i32_0 : i32, i32
  }
  func.func @transform_5(%arg0: i32, %arg1: i32) -> (i32, i32) {
    %c0_i32 = arith.constant 0 : i32
    %c0_i32_0 = arith.constant 0 : i32
    %c0_i32_1 = arith.constant 0 : i32
    return %c0_i32, %c0_i32_0 : i32, i32
  }
  func.func @transform_6(%arg0: i32, %arg1: i32) -> (i32, i32) {
    %c0_i32 = arith.constant 0 : i32
    %c0_i32_0 = arith.constant 0 : i32
    %c0_i32_1 = arith.constant 0 : i32
    return %c0_i32, %c0_i32_0 : i32, i32
  }
}

</mosaic_0001>

<llo_original>
// kernel: vdp_forward.2
$region0: #{vdp_forward.2}
  #allocation0 [shape = 'u32[]', space=smem, size = 0x4, offset = 0x4, fixed_abs, tag = 'smem constant byte address 0x4 - core index']
  #allocation1 [shape = 'u32[72,128]{1,0:T(1,128)}', space=vmem, size = 0x9000, scoped, tag = 'internal scratch']
  #allocation2 [shape = 'f32[8,128]{1,0:T(8,128)}', space=vmem, size = 0x1000, scoped, tag = 'scratch operand']
  %s0 = inlined_call_operand.vmem [shape: f32[8,12], index: 0, kind: input, shape index: {}]
  %s1 = inlined_call_operand.vmem [shape: f32[12,32], index: 1, kind: input, shape index: {}]
  %s2 = inlined_call_operand.vmem [shape: f32[32,16], index: 2, kind: input, shape index: {}]
  %s3 = inlined_call_operand.vmem [shape: f32[16,8], index: 3, kind: input, shape index: {}]
  %s4 = inlined_call_operand.vmem [shape: f32[8,1], index: 4, kind: input, shape index: {}]
  %s5 = inlined_call_operand.vmem [shape: f32[24,128], index: 5, kind: input, shape index: {}]
  %s6 = inlined_call_operand.vmem [shape: f32[8,128], index: 6, kind: output, shape index: {}]
  %s7 = sld [smem:[#allocation0]]
  $region93: #{vdp_forward.2} parent=0
    _
  %s9 = ssub.s32 1, %s7
  %s10 = scalar_select 0, %s9, %s7
  loop: start=0, step=1, limit=6
  $region2: #{vdp_forward.2} parent=0 // loop_pre_header
    _
  $region3: #{vdp_forward.2} parent=0 // loop_header
    %s12 = sphi 0, %s16
    %p13 = scmp.ge.s32.totalorder %s12, 6
    %s19 = sphi 0, %s31
    %s20 = sphi 0, %s27
    %s21 = sphi 0, %s19
    %s22 = sphi 0, %s20
    %s23 = sphi 0, %s21
    %s24 = sphi 0, %s22
    %s34 = sphi 0, %s36
    %s37 = sphi 0, %s34
    %s38 = sphi 0, %s37
    %s54 = sphi 0, %s38
    %s58 = sphi 0, %s58
    %s60 = sphi 0, %s58
    %s61 = sphi 0, %s60
    %s75 = sphi 0, %s61
    %s79 = sphi 0, %s79
    %s81 = sphi 0, %s79
    %s82 = sphi 0, %s81
    %s96 = sphi 0, %s82
    %s100 = sphi 0, %s100
    %s102 = sphi 0, %s100
    %s103 = sphi 0, %s102
    %s117 = sphi 0, %s103
    %s121 = sphi 0, %s121
    %s123 = sphi 0, %s121
    %s124 = sphi 0, %s123
    %s138 = sphi 0, %s124
    %s142 = sphi 0, %s142
    %s144 = sphi 0, %s142
    %s145 = sphi 0, %s144
    %s159 = sphi 0, %s145
    %s163 = sphi 0, %s163
    %s165 = sphi 0, %s163
    %s166 = sphi 0, %s165
    %s180 = sphi 0, %s166
  $region4: #{vdp_forward.2} parent=0 // loop_header_branch
    %15 = sbr.rel (%p13) target = $region8
  $region5: #{vdp_forward.2} parent=0 // loop_body
    %s17 = ssub.s32 %s12, 1
    %s18 = ssub.s32 %s12, 2
    %s25 = sadd.s32 1, %s20
    %p26 = scmp.ge.s32.totalorder %s25, 1
    %s27 = scalar_select %p26, 0, %s25
    %s28 = sadd.s32 1, %s19
    %s29 = scalar_select %p26, %s28, %s19
    %p30 = scmp.ge.s32.totalorder %s29, 4
    %s31 = scalar_select %p30, 0, %s29
    %s32 = ssub.s32 %s20, %s27
    %p33 = scmp.eq.s32.totalorder %s32, 0
    %s35 = sadd.s32 %s34, 1
    %s36 = scalar_select %p33, %s34, %s35
    %p39 = pneg %p33
    %p40 = scmp.eq.s32.totalorder %s12, 3
    %p41 = por %p39, %p40
    %p42 = scmp.ne.s32.totalorder %s34, %s37
    %p43 = scmp.eq.s32.totalorder %s12, 0
    %p44 = por %p42, %p43
    %p45 = scmp.ne.s32.totalorder %s34, %s37
    %p46 = scmp.eq.s32.totalorder %s17, 3
    %p47 = por %p45, %p46
    %p48 = scmp.ne.s32.totalorder %s37, %s38
    %p49 = scmp.eq.s32.totalorder %s17, 0
    %p50 = por %p48, %p49
    %p51 = scmp.ne.s32.totalorder %s37, %s38
    %p52 = scmp.eq.s32.totalorder %s18, 3
    %p53 = por %p51, %p52
    %p55 = scmp.ne.s32.totalorder %s38, %s54
    %p56 = scmp.eq.s32.totalorder %s18, 0
    %p57 = por %p55, %p56
    %s59 = sadd.s32 %s58, 1
    %p62 = scmp.eq.s32.totalorder %s12, 3
    %p63 = scmp.ne.s32.totalorder %s58, %s60
    %p64 = scmp.eq.s32.totalorder %s12, 0
    %p65 = por %p63, %p64
    %p66 = scmp.ne.s32.totalorder %s58, %s60
    %p67 = scmp.eq.s32.totalorder %s17, 3
    %p68 = por %p66, %p67
    %p69 = scmp.ne.s32.totalorder %s60, %s61
    %p70 = scmp.eq.s32.totalorder %s17, 0
    %p71 = por %p69, %p70
    %p72 = scmp.ne.s32.totalorder %s60, %s61
    %p73 = scmp.eq.s32.totalorder %s18, 3
    %p74 = por %p72, %p73
    %p76 = scmp.ne.s32.totalorder %s61, %s75
    %p77 = scmp.eq.s32.totalorder %s18, 0
    %p78 = por %p76, %p77
    %s80 = sadd.s32 %s79, 1
    %p83 = scmp.eq.s32.totalorder %s12, 3
    %p84 = scmp.ne.s32.totalorder %s79, %s81
    %p85 = scmp.eq.s32.totalorder %s12, 0
    %p86 = por %p84, %p85
    %p87 = scmp.ne.s32.totalorder %s79, %s81
    %p88 = scmp.eq.s32.totalorder %s17, 3
    %p89 = por %p87, %p88
    %p90 = scmp.ne.s32.totalorder %s81, %s82
    %p91 = scmp.eq.s32.totalorder %s17, 0
    %p92 = por %p90, %p91
    %p93 = scmp.ne.s32.totalorder %s81, %s82
    %p94 = scmp.eq.s32.totalorder %s18, 3
    %p95 = por %p93, %p94
    %p97 = scmp.ne.s32.totalorder %s82, %s96
    %p98 = scmp.eq.s32.totalorder %s18, 0
    %p99 = por %p97, %p98
    %s101 = sadd.s32 %s100, 1
    %p104 = scmp.eq.s32.totalorder %s12, 3
    %p105 = scmp.ne.s32.totalorder %s100, %s102
    %p106 = scmp.eq.s32.totalorder %s12, 0
    %p107 = por %p105, %p106
    %p108 = scmp.ne.s32.totalorder %s100, %s102
    %p109 = scmp.eq.s32.totalorder %s17, 3
    %p110 = por %p108, %p109
    %p111 = scmp.ne.s32.totalorder %s102, %s103
    %p112 = scmp.eq.s32.totalorder %s17, 0
    %p113 = por %p111, %p112
    %p114 = scmp.ne.s32.totalorder %s102, %s103
    %p115 = scmp.eq.s32.totalorder %s18, 3
    %p116 = por %p114, %p115
    %p118 = scmp.ne.s32.totalorder %s103, %s117
    %p119 = scmp.eq.s32.totalorder %s18, 0
    %p120 = por %p118, %p119
    %s122 = sadd.s32 %s121, 1
    %p125 = scmp.eq.s32.totalorder %s12, 3
    %p126 = scmp.ne.s32.totalorder %s121, %s123
    %p127 = scmp.eq.s32.totalorder %s12, 0
    %p128 = por %p126, %p127
    %p129 = scmp.ne.s32.totalorder %s121, %s123
    %p130 = scmp.eq.s32.totalorder %s17, 3
    %p131 = por %p129, %p130
    %p132 = scmp.ne.s32.totalorder %s123, %s124
    %p133 = scmp.eq.s32.totalorder %s17, 0
    %p134 = por %p132, %p133
    %p135 = scmp.ne.s32.totalorder %s123, %s124
    %p136 = scmp.eq.s32.totalorder %s18, 3
    %p137 = por %p135, %p136
    %p139 = scmp.ne.s32.totalorder %s124, %s138
    %p140 = scmp.eq.s32.totalorder %s18, 0
    %p141 = por %p139, %p140
    %s143 = sadd.s32 %s142, 1
    %p146 = scmp.eq.s32.totalorder %s12, 3
    %p147 = scmp.ne.s32.totalorder %s142, %s144
    %p148 = scmp.eq.s32.totalorder %s12, 0
    %p149 = por %p147, %p148
    %p150 = scmp.ne.s32.totalorder %s142, %s144
    %p151 = scmp.eq.s32.totalorder %s17, 3
    %p152 = por %p150, %p151
    %p153 = scmp.ne.s32.totalorder %s144, %s145
    %p154 = scmp.eq.s32.totalorder %s17, 0
    %p155 = por %p153, %p154
    %p156 = scmp.ne.s32.totalorder %s144, %s145
    %p157 = scmp.eq.s32.totalorder %s18, 3
    %p158 = por %p156, %p157
    %p160 = scmp.ne.s32.totalorder %s145, %s159
    %p161 = scmp.eq.s32.totalorder %s18, 0
    %p162 = por %p160, %p161
    %s164 = sadd.s32 %s163, 1
    %p167 = scmp.eq.s32.totalorder %s12, 3
    %p168 = scmp.ne.s32.totalorder %s163, %s165
    %p169 = scmp.eq.s32.totalorder %s12, 0
    %p170 = por %p168, %p169
    %p171 = scmp.ne.s32.totalorder %s163, %s165
    %p172 = scmp.eq.s32.totalorder %s17, 3
    %p173 = por %p171, %p172
    %p174 = scmp.ne.s32.totalorder %s165, %s166
    %p175 = scmp.eq.s32.totalorder %s17, 0
    %p176 = por %p174, %p175
    %p177 = scmp.ne.s32.totalorder %s165, %s166
    %p178 = scmp.eq.s32.totalorder %s18, 3
    %p179 = por %p177, %p178
    %p181 = scmp.ne.s32.totalorder %s166, %s180
    %p182 = scmp.eq.s32.totalorder %s18, 0
    %p183 = por %p181, %p182
    %p184 = scmp.le.s32.totalorder 1, %s12
    %p185 = scmp.lt.s32.totalorder %s12, 5
    %p186 = pnand %p184, %p185
    %p187 = pneg %p186
    // Predicated region
    $region9: #{vdp_forward.2} parent=5 // pred_check
      _
    $region10: #{vdp_forward.2} parent=5 // pred_check_branch
      %189 = sbr.rel (%p186) target = $region12
    $region11: #{vdp_forward.2} parent=5 // pred_region
      %s190 = ssub.s32 %s12, 1
      // Predicated region
      $region13: #{vdp_forward.2} parent=11 // pred_check
        %p191 = pneg %p50
      $region14: #{vdp_forward.2} parent=11 // pred_check_branch
        %193 = sbr.rel (%p191) target = $region16
      $region15: #{vdp_forward.2} parent=11 // pred_region
        %p194 = scmp.lt.s32.totalorder %s22, 0
        %s195 = scalar_select %p194, %s22, 0
        %s196 = smul.addr %s195, 8
        %s197 = scalar_lea.vmem %s0, %s196
      $region16: #{vdp_forward.2} parent=11 // pred_fallthru
        _
      // Predicated region
      $region17: #{vdp_forward.2} parent=11 // pred_check
        %p198 = pneg %p71
      $region18: #{vdp_forward.2} parent=11 // pred_check_branch
        %200 = sbr.rel (%p198) target = $region20
      $region19: #{vdp_forward.2} parent=11 // pred_region
        _
      $region20: #{vdp_forward.2} parent=11 // pred_fallthru
        _
      // Predicated region
      $region21: #{vdp_forward.2} parent=11 // pred_check
        %p201 = pneg %p92
      $region22: #{vdp_forward.2} parent=11 // pred_check_branch
        %203 = sbr.rel (%p201) target = $region24
      $region23: #{vdp_forward.2} parent=11 // pred_region
        _
      $region24: #{vdp_forward.2} parent=11 // pred_fallthru
        _
      // Predicated region
      $region25: #{vdp_forward.2} parent=11 // pred_check
        %p204 = pneg %p113
      $region26: #{vdp_forward.2} parent=11 // pred_check_branch
        %206 = sbr.rel (%p204) target = $region28
      $region27: #{vdp_forward.2} parent=11 // pred_region
        _
      $region28: #{vdp_forward.2} parent=11 // pred_fallthru
        _
      // Predicated region
      $region29: #{vdp_forward.2} parent=11 // pred_check
        %p207 = pneg %p134
      $region30: #{vdp_forward.2} parent=11 // pred_check_branch
        %209 = sbr.rel (%p207) target = $region32
      $region31: #{vdp_forward.2} parent=11 // pred_region
        _
      $region32: #{vdp_forward.2} parent=11 // pred_fallthru
        _
      // Predicated region
      $region33: #{vdp_forward.2} parent=11 // pred_check
        %p210 = pneg %p155
      $region34: #{vdp_forward.2} parent=11 // pred_check_branch
        %212 = sbr.rel (%p210) target = $region36
      $region35: #{vdp_forward.2} parent=11 // pred_region
        _
      $region36: #{vdp_forward.2} parent=11 // pred_fallthru
        _
    $region12: #{vdp_forward.2} parent=5 // pred_fallthru
      _
    %p213 = scmp.lt.s32.totalorder %s12, 4
    // Predicated region
    $region37: #{vdp_forward.2} parent=5 // pred_check
      %p214 = pneg %p213
    $region38: #{vdp_forward.2} parent=5 // pred_check_branch
      %216 = sbr.rel (%p214) target = $region40
    $region39: #{vdp_forward.2} parent=5 // pred_region
      _
    $region40: #{vdp_forward.2} parent=5 // pred_fallthru
      _
    %p217 = scmp.le.s32.totalorder 1, %s12
    %p218 = scmp.lt.s32.totalorder %s12, 5
    %p219 = pnand %p217, %p218
    %p220 = pneg %p219
    // Predicated region
    $region41: #{vdp_forward.2} parent=5 // pred_check
      _
    $region42: #{vdp_forward.2} parent=5 // pred_check_branch
      %222 = sbr.rel (%p219) target = $region44
    $region43: #{vdp_forward.2} parent=5 // pred_region
      %s223 = ssub.s32 %s12, 1
      %p224 = scmp.lt.s32.totalorder %s22, 0
      %s225 = scalar_select %p224, %s22, 0
      %s226 = smul.addr %s225, 8
      %s227 = scalar_lea.vmem %s0, %s226
      %p228 = pneg %p50
      %p229 = pneg %p47
      %p230 = pneg %p71
      %p231 = pneg %p68
      %p232 = pneg %p92
      %p233 = pneg %p89
      %p234 = pneg %p113
      %p235 = pneg %p110
      %p236 = pneg %p134
      %p237 = pneg %p131
      %p238 = pneg %p155
      %p239 = pneg %p152
      %p240 = pneg %p176
      %p241 = pneg %p173
      %p242 = scmp.lt.s32.totalorder %s22, 0
      %s243 = scalar_select %p242, %s22, 0
      %s244 = smul.addr %s243, 8
      %s245 = scalar_lea.vmem %s0, %s244
      %p246 = scmp.eq.s32.totalorder %s21, 0
      %p247 = scmp.eq.s32.totalorder %s22, 0
      %p248 = pnand %p246, %p247
      %p249 = pneg %p248
      // Predicated region
      $region45: #{vdp_forward.2} parent=43 // pred_check
        _
      $region46: #{vdp_forward.2} parent=43 // pred_check_branch
        %251 = sbr.rel (%p248) target = $region48
      $region47: #{vdp_forward.2} parent=43 // pred_region
        %252 = vst [vmem:[#allocation2] sm:$0xff] 0.0
        %253 = vst [vmem:[%s6] sm:$0xf] 0.0
        %254 = vst [vmem:[%s6 + $0x4] sm:$0xf] 1.0
      $region48: #{vdp_forward.2} parent=43 // pred_fallthru
        _
      %v255 = vld [vmem:[%s245] sm:$0xff]
      %v256 = vld [vmem:[%s5] sm:$0xff]
      %v257 = vld [vmem:[%s5 + $0x8] sm:$0xff]
      %v258 = vld [vmem:[%s1] sm:$0xff]
      %v259 = vld [vmem:[%s1 + $0x8] sm:$0xf]
      %v260 = vld [vmem:[%s2] sm:$0xff]
      %v261 = vld [vmem:[%s2 + $0x8] sm:$0xff]
      %v262 = vld [vmem:[%s2 + $0x10] sm:$0xff]
      %v263 = vld [vmem:[%s2 + $0x18] sm:$0xff]
      %v264 = vld [vmem:[%s3] sm:$0xff]
      %v265 = vld [vmem:[%s3 + $0x8] sm:$0xff]
      %v266 = vld [vmem:[%s4] sm:$0xff]
      %v267 = vlaneseq
      %v268 = vshrl.u32 %v267, 7
      %s269 = smul.u32 %s22, 8
      %v270 = vstv %s269
      %v271 = vadd.s32 %v268, %v270
      %vm272 = vcmp.lt.s32.totalorder %v271, 8
      %v273 = vsel %vm272, 1, 0
      %v274 = vcvt.s32.f32 %v273
      %v275 = vperm.slane %v256, 0
      %vm276 = vcmask 97280
      %v278 = vsel %vm276, %v255, 0
      %vm280 = vcmask 1043456
      %v282 = vsel %vm280, %v259, 0
      %284 = vmatpush.msra.mxu0 0.0
      %285 = vmatpush.msra.mxu0 0.0
      %286 = vmatpush.msra.mxu0 0.0
      %287 = vmatpush.msra.mxu0 0.0
      %288 = vmatpush.msra.mxu0 0.0
      %289 = vmatpush.msra.mxu0 0.0
      %290 = vmatpush.msra.mxu0 0.0
      %291 = vmatpush.msra.mxu0 0.0
      %292 = vmatpush.msra.mxu0 0.0
      %293 = vmatpush.msra.mxu0 0.0
      %294 = vmatpush.msra.mxu0 0.0
      %295 = vmatpush.msra.mxu0 0.0
      %296 = vmatpush.msra.mxu0 0.0
      %297 = vmatpush.msra.mxu0 0.0
      %298 = vmatpush.msra.mxu0 %v282
      %299 = vmatpush.msra.mxu0 %v258
      %300 = vmatmul.f32.gmra.mxu0 %v278
      %v301 = vpop.f32.mrf.mxu0
      %v302 = vadd.f32 %v275, %v301
      %303 = vdwg.mxu0
      // Predicated region
      $region49: #{vdp_forward.2} parent=43 // pred_check
        %p304 = pneg %p246
      $region50: #{vdp_forward.2} parent=43 // pred_check_branch
        %306 = sbr.rel (%p304) target = $region52
      $region51: #{vdp_forward.2} parent=43 // pred_region
        %v307 = vmul.f32 %v274, %v302
        %v308 = vld [vmem:[#allocation2] sm:$0x1]
        %vm309 = vcmask 261120
        %v310 = vsel %vm309, %v307, 0.0
        %v311 = vrot.slane %v310, 4
        %v312 = vadd.f32 %v310, %v311
        %v313 = vrot.slane %v312, 2
        %v314 = vadd.f32 %v312, %v313
        %v315 = vrot.slane %v314, 1
        %v316 = vadd.f32 %v314, %v315
        %v317 = vadd.f32 %v308, %v316
        %vm318 = vcmask 253952
        %319 = vst.msk [vmem:[#allocation2] sm:$0x1] %vm318, %v317
        %v320 = vld [vmem:[#allocation2 + $0x4] sm:$0x1]
        %v321 = vmul.f32 %v307, %v302
        %v322 = vsel %vm309, %v321, 0.0
        %v323 = vrot.slane %v322, 4
        %v324 = vadd.f32 %v322, %v323
        %v325 = vrot.slane %v324, 2
        %v326 = vadd.f32 %v324, %v325
        %v327 = vrot.slane %v326, 1
        %v328 = vadd.f32 %v326, %v327
        %v329 = vadd.f32 %v320, %v328
        %330 = vst.msk [vmem:[#allocation2 + $0x4] sm:$0x1] %vm318, %v329
      $region52: #{vdp_forward.2} parent=43 // pred_fallthru
        _
      // Predicated region
      $region53: #{vdp_forward.2} parent=43 // pred_check
        _
      $region54: #{vdp_forward.2} parent=43 // pred_check_branch
        %332 = sbr.rel (%p248) target = $region56
      $region55: #{vdp_forward.2} parent=43 // pred_region
        %v333 = vld [vmem:[#allocation2] sm:$0x1]
        %v334 = vmul.f32 %v333, 0.125
        %v335 = vld [vmem:[#allocation2 + $0x4] sm:$0x1]
        %v336 = vmul.f32 %v335, 0.125
        %v337 = vmul.f32 %v334, %v334
        %v338 = vsub.f32 %v336, %v337
        %v339 = vmax.f32 %v338, 0.0
        %vm340 = vcmask 253952
        %341 = vst.msk [vmem:[%s6] sm:$0x1] %vm340, %v334
        %v342 = vadd.f32 %v339, 1e-05
        %v343 = vrsqrt.pop %v342
        %v344 = vmul.f32 %v343, %v342
        %v345 = vmul.f32 %v344, %v343
        %v346 = vmul.f32 0.5, %v345
        %v347 = vsub.f32 1.5, %v346
        %v348 = vmul.f32 %v343, %v347
        %vm349 = vweird.f32 %v342
        %vm350 = vweird.f32 %v343
        %vm351 = vmor %vm349, %vm350
        %v352 = vsel %vm351, %v343, %v348
        %353 = vst.msk [vmem:[%s6 + $0x4] sm:$0x1] %vm340, %v352
      $region56: #{vdp_forward.2} parent=43 // pred_fallthru
        _
      %v354 = vld [vmem:[%s6] sm:$0x1]
      %v355 = vld [vmem:[%s6 + $0x4] sm:$0x1]
      %v356 = vperm.slane %v354, 0
      %v357 = vsub.f32 %v302, %v356
      %v358 = vperm.slane %v355, 0
      %v359 = vmul.f32 %v357, %v358
      %v360 = vperm.slane %v256, 2
      %v361 = vmul.f32 %v359, %v360
      %v362 = vperm.slane %v256, 3
      %v363 = vadd.f32 %v361, %v362
      %v364 = vmax.f32 %v363, 0.0
      %v365 = vperm.slane %v256, 4
      %vm366 = vcmask 261120
      %v368 = vsel %vm366, %v364, 0
      %370 = vmatpush.msra.mxu0 0.0
      %371 = vmatpush.msra.mxu0 0.0
      %372 = vmatpush.msra.mxu0 0.0
      %373 = vmatpush.msra.mxu0 0.0
      %374 = vmatpush.msra.mxu0 0.0
      %375 = vmatpush.msra.mxu0 0.0
      %376 = vmatpush.msra.mxu0 0.0
      %377 = vmatpush.msra.mxu0 0.0
      %378 = vmatpush.msra.mxu0 0.0
      %379 = vmatpush.msra.mxu0 0.0
      %380 = vmatpush.msra.mxu0 0.0
      %381 = vmatpush.msra.mxu0 0.0
      %382 = vmatpush.msra.mxu0 %v263
      %383 = vmatpush.msra.mxu0 %v262
      %384 = vmatpush.msra.mxu0 %v261
      %385 = vmatpush.msra.mxu0 %v260
      %386 = vmatmul.f32.gmra.mxu0 %v368
      %v387 = vpop.f32.mrf.mxu0
      %v388 = vadd.f32 %v365, %v387
      %389 = vdwg.mxu0
      %p390 = scmp.eq.s32.totalorder %s21, 1
      // Predicated region
      $region57: #{vdp_forward.2} parent=43 // pred_check
        %p391 = pneg %p390
      $region58: #{vdp_forward.2} parent=43 // pred_check_branch
        %393 = sbr.rel (%p391) target = $region60
      $region59: #{vdp_forward.2} parent=43 // pred_region
        %v394 = vmul.f32 %v274, %v388
        %v395 = vld [vmem:[#allocation2 + $0x1] sm:$0x1]
        %vm396 = vcmask 130048
        %v397 = vsel %vm396, %v394, 0.0
        %v398 = vrot.slane %v397, 4
        %v399 = vadd.f32 %v397, %v398
        %v400 = vrot.slane %v399, 2
        %v401 = vadd.f32 %v399, %v400
        %v402 = vrot.slane %v401, 1
        %v403 = vadd.f32 %v401, %v402
        %v404 = vadd.f32 %v395, %v403
        %vm405 = vcmask 122880
        %406 = vst.msk [vmem:[#allocation2 + $0x1] sm:$0x1] %vm405, %v404
        %v407 = vld [vmem:[#allocation2 + $0x5] sm:$0x1]
        %v408 = vmul.f32 %v394, %v388
        %v409 = vsel %vm396, %v408, 0.0
        %v410 = vrot.slane %v409, 4
        %v411 = vadd.f32 %v409, %v410
        %v412 = vrot.slane %v411, 2
        %v413 = vadd.f32 %v411, %v412
        %v414 = vrot.slane %v413, 1
        %v415 = vadd.f32 %v413, %v414
        %v416 = vadd.f32 %v407, %v415
        %417 = vst.msk [vmem:[#allocation2 + $0x5] sm:$0x1] %vm405, %v416
      $region60: #{vdp_forward.2} parent=43 // pred_fallthru
        _
      %p418 = pnand %p390, %p247
      %p419 = pneg %p418
      // Predicated region
      $region61: #{vdp_forward.2} parent=43 // pred_check
        _
      $region62: #{vdp_forward.2} parent=43 // pred_check_branch
        %421 = sbr.rel (%p418) target = $region64
      $region63: #{vdp_forward.2} parent=43 // pred_region
        %v422 = vld [vmem:[#allocation2 + $0x1] sm:$0x1]
        %v423 = vmul.f32 %v422, 0.125
        %v424 = vld [vmem:[#allocation2 + $0x5] sm:$0x1]
        %v425 = vmul.f32 %v424, 0.125
        %v426 = vmul.f32 %v423, %v423
        %v427 = vsub.f32 %v425, %v426
        %v428 = vmax.f32 %v427, 0.0
        %vm429 = vcmask 122880
        %430 = vst.msk [vmem:[%s6 + $0x1] sm:$0x1] %vm429, %v423
        %v431 = vadd.f32 %v428, 1e-05
        %v432 = vrsqrt.pop %v431
        %v433 = vmul.f32 %v432, %v431
        %v434 = vmul.f32 %v433, %v432
        %v435 = vmul.f32 0.5, %v434
        %v436 = vsub.f32 1.5, %v435
        %v437 = vmul.f32 %v432, %v436
        %vm438 = vweird.f32 %v431
        %vm439 = vweird.f32 %v432
        %vm440 = vmor %vm438, %vm439
        %v441 = vsel %vm440, %v432, %v437
        %442 = vst.msk [vmem:[%s6 + $0x5] sm:$0x1] %vm429, %v441
      $region64: #{vdp_forward.2} parent=43 // pred_fallthru
        _
      %v443 = vld [vmem:[%s6 + $0x1] sm:$0x1]
      %v444 = vld [vmem:[%s6 + $0x5] sm:$0x1]
      %v445 = vperm.slane %v443, 0
      %v446 = vsub.f32 %v388, %v445
      %v447 = vperm.slane %v444, 0
      %v448 = vmul.f32 %v446, %v447
      %v449 = vperm.slane %v256, 6
      %v450 = vmul.f32 %v448, %v449
      %v451 = vperm.slane %v256, 7
      %v452 = vadd.f32 %v450, %v451
      %v453 = vmax.f32 %v452, 0.0
      %v454 = vperm.slane %v257, 0
      %vm455 = vcmask 130048
      %v457 = vsel %vm455, %v453, 0
      %459 = vmatpush.msra.mxu0 0.0
      %460 = vmatpush.msra.mxu0 0.0
      %461 = vmatpush.msra.mxu0 0.0
      %462 = vmatpush.msra.mxu0 0.0
      %463 = vmatpush.msra.mxu0 0.0
      %464 = vmatpush.msra.mxu0 0.0
      %465 = vmatpush.msra.mxu0 0.0
      %466 = vmatpush.msra.mxu0 0.0
      %467 = vmatpush.msra.mxu0 0.0
      %468 = vmatpush.msra.mxu0 0.0
      %469 = vmatpush.msra.mxu0 0.0
      %470 = vmatpush.msra.mxu0 0.0
      %471 = vmatpush.msra.mxu0 0.0
      %472 = vmatpush.msra.mxu0 0.0
      %473 = vmatpush.msra.mxu0 %v265
      %474 = vmatpush.msra.mxu0 %v264
      %475 = vmatmul.f32.gmra.mxu0 %v457
      %v476 = vpop.f32.mrf.mxu0
      %v477 = vadd.f32 %v454, %v476
      %478 = vdwg.mxu0
      %p479 = scmp.eq.s32.totalorder %s21, 2
      // Predicated region
      $region65: #{vdp_forward.2} parent=43 // pred_check
        %p480 = pneg %p479
      $region66: #{vdp_forward.2} parent=43 // pred_check_branch
        %482 = sbr.rel (%p480) target = $region68
      $region67: #{vdp_forward.2} parent=43 // pred_region
        %v483 = vmul.f32 %v274, %v477
        %v484 = vld [vmem:[#allocation2 + $0x2] sm:$0x1]
        %vm485 = vcmask 64512
        %v486 = vsel %vm485, %v483, 0.0
        %v487 = vrot.slane %v486, 4
        %v488 = vadd.f32 %v486, %v487
        %v489 = vrot.slane %v488, 2
        %v490 = vadd.f32 %v488, %v489
        %v491 = vrot.slane %v490, 1
        %v492 = vadd.f32 %v490, %v491
        %v493 = vadd.f32 %v484, %v492
        %vm494 = vcmask 57344
        %495 = vst.msk [vmem:[#allocation2 + $0x2] sm:$0x1] %vm494, %v493
        %v496 = vld [vmem:[#allocation2 + $0x6] sm:$0x1]
        %v497 = vmul.f32 %v483, %v477
        %v498 = vsel %vm485, %v497, 0.0
        %v499 = vrot.slane %v498, 4
        %v500 = vadd.f32 %v498, %v499
        %v501 = vrot.slane %v500, 2
        %v502 = vadd.f32 %v500, %v501
        %v503 = vrot.slane %v502, 1
        %v504 = vadd.f32 %v502, %v503
        %v505 = vadd.f32 %v496, %v504
        %506 = vst.msk [vmem:[#allocation2 + $0x6] sm:$0x1] %vm494, %v505
      $region68: #{vdp_forward.2} parent=43 // pred_fallthru
        _
      %p507 = pnand %p479, %p247
      %p508 = pneg %p507
      // Predicated region
      $region69: #{vdp_forward.2} parent=43 // pred_check
        _
      $region70: #{vdp_forward.2} parent=43 // pred_check_branch
        %510 = sbr.rel (%p507) target = $region72
      $region71: #{vdp_forward.2} parent=43 // pred_region
        %v511 = vld [vmem:[#allocation2 + $0x2] sm:$0x1]
        %v512 = vmul.f32 %v511, 0.125
        %v513 = vld [vmem:[#allocation2 + $0x6] sm:$0x1]
        %v514 = vmul.f32 %v513, 0.125
        %v515 = vmul.f32 %v512, %v512
        %v516 = vsub.f32 %v514, %v515
        %v517 = vmax.f32 %v516, 0.0
        %vm518 = vcmask 57344
        %519 = vst.msk [vmem:[%s6 + $0x2] sm:$0x1] %vm518, %v512
        %v520 = vadd.f32 %v517, 1e-05
        %v521 = vrsqrt.pop %v520
        %v522 = vmul.f32 %v521, %v520
        %v523 = vmul.f32 %v522, %v521
        %v524 = vmul.f32 0.5, %v523
        %v525 = vsub.f32 1.5, %v524
        %v526 = vmul.f32 %v521, %v525
        %vm527 = vweird.f32 %v520
        %vm528 = vweird.f32 %v521
        %vm529 = vmor %vm527, %vm528
        %v530 = vsel %vm529, %v521, %v526
        %531 = vst.msk [vmem:[%s6 + $0x6] sm:$0x1] %vm518, %v530
      $region72: #{vdp_forward.2} parent=43 // pred_fallthru
        _
      %v532 = vld [vmem:[%s6 + $0x2] sm:$0x1]
      %v533 = vld [vmem:[%s6 + $0x6] sm:$0x1]
      %v534 = vperm.slane %v532, 0
      %v535 = vsub.f32 %v477, %v534
      %v536 = vperm.slane %v533, 0
      %v537 = vmul.f32 %v535, %v536
      %v538 = vperm.slane %v257, 2
      %v539 = vmul.f32 %v537, %v538
      %v540 = vperm.slane %v257, 3
      %v541 = vadd.f32 %v539, %v540
      %v542 = vmax.f32 %v541, 0.0
      %v543 = vperm.slane %v257, 4
      %vm544 = vcmask 64512
      %v546 = vsel %vm544, %v542, 0
      %548 = vmatpush.msra.mxu0 0.0
      %549 = vmatpush.msra.mxu0 0.0
      %550 = vmatpush.msra.mxu0 0.0
      %551 = vmatpush.msra.mxu0 0.0
      %552 = vmatpush.msra.mxu0 0.0
      %553 = vmatpush.msra.mxu0 0.0
      %554 = vmatpush.msra.mxu0 0.0
      %555 = vmatpush.msra.mxu0 0.0
      %556 = vmatpush.msra.mxu0 0.0
      %557 = vmatpush.msra.mxu0 0.0
      %558 = vmatpush.msra.mxu0 0.0
      %559 = vmatpush.msra.mxu0 0.0
      %560 = vmatpush.msra.mxu0 0.0
      %561 = vmatpush.msra.mxu0 0.0
      %562 = vmatpush.msra.mxu0 0.0
      %563 = vmatpush.msra.mxu0 %v266
      %564 = vmatmul.f32.gmra.mxu0 %v546
      %v565 = vpop.f32.mrf.mxu0
      %v566 = vadd.f32 %v543, %v565
      %567 = vdwg.mxu0
      %p568 = scmp.eq.s32.totalorder %s21, 3
      // Predicated region
      $region73: #{vdp_forward.2} parent=43 // pred_check
        %p569 = pneg %p568
      $region74: #{vdp_forward.2} parent=43 // pred_check_branch
        %571 = sbr.rel (%p569) target = $region76
      $region75: #{vdp_forward.2} parent=43 // pred_region
        %v572 = vmul.f32 %v274, %v566
        %v573 = vld [vmem:[#allocation2 + $0x3] sm:$0x1]
        %vm574 = vcmask 7168
        %v575 = vsel %vm574, %v572, 0.0
        %v576 = vrot.slane %v575, 4
        %v577 = vadd.f32 %v575, %v576
        %v578 = vrot.slane %v577, 2
        %v579 = vadd.f32 %v577, %v578
        %v580 = vrot.slane %v579, 1
        %v581 = vadd.f32 %v579, %v580
        %v582 = vadd.f32 %v573, %v581
        %vm583 = vcmask 0
        %584 = vst.msk [vmem:[#allocation2 + $0x3] sm:$0x1] %vm583, %v582
        %v585 = vld [vmem:[#allocation2 + $0x7] sm:$0x1]
        %v586 = vmul.f32 %v572, %v566
        %v587 = vsel %vm574, %v586, 0.0
        %v588 = vrot.slane %v587, 4
        %v589 = vadd.f32 %v587, %v588
        %v590 = vrot.slane %v589, 2
        %v591 = vadd.f32 %v589, %v590
        %v592 = vrot.slane %v591, 1
        %v593 = vadd.f32 %v591, %v592
        %v594 = vadd.f32 %v585, %v593
        %595 = vst.msk [vmem:[#allocation2 + $0x7] sm:$0x1] %vm583, %v594
      $region76: #{vdp_forward.2} parent=43 // pred_fallthru
        _
      %p596 = pnand %p568, %p247
      %p597 = pneg %p596
      // Predicated region
      $region77: #{vdp_forward.2} parent=43 // pred_check
        _
      $region78: #{vdp_forward.2} parent=43 // pred_check_branch
        %599 = sbr.rel (%p596) target = $region80
      $region79: #{vdp_forward.2} parent=43 // pred_region
        %v600 = vld [vmem:[#allocation2 + $0x3] sm:$0x1]
        %v601 = vmul.f32 %v600, 0.125
        %v602 = vld [vmem:[#allocation2 + $0x7] sm:$0x1]
        %v603 = vmul.f32 %v602, 0.125
        %v604 = vmul.f32 %v601, %v601
        %v605 = vsub.f32 %v603, %v604
        %v606 = vmax.f32 %v605, 0.0
        %vm607 = vcmask 0
        %608 = vst.msk [vmem:[%s6 + $0x3] sm:$0x1] %vm607, %v601
        %v609 = vadd.f32 %v606, 1e-05
        %v610 = vrsqrt.pop %v609
        %v611 = vmul.f32 %v610, %v609
        %v612 = vmul.f32 %v611, %v610
        %v613 = vmul.f32 0.5, %v612
        %v614 = vsub.f32 1.5, %v613
        %v615 = vmul.f32 %v610, %v614
        %vm616 = vweird.f32 %v609
        %vm617 = vweird.f32 %v610
        %vm618 = vmor %vm616, %vm617
        %v619 = vsel %vm618, %v610, %v615
        %620 = vst.msk [vmem:[%s6 + $0x7] sm:$0x1] %vm607, %v619
      $region80: #{vdp_forward.2} parent=43 // pred_fallthru
        _
      // Predicated region
      $region81: #{vdp_forward.2} parent=43 // pred_check
        %p621 = pneg %p173
      $region82: #{vdp_forward.2} parent=43 // pred_check_branch
        %623 = sbr.rel (%p621) target = $region84
      $region83: #{vdp_forward.2} parent=43 // pred_region
        _
      $region84: #{vdp_forward.2} parent=43 // pred_fallthru
        _
      // Predicated region
      $region85: #{vdp_forward.2} parent=43 // pred_check
        %p624 = pneg %p173
      $region86: #{vdp_forward.2} parent=43 // pred_check_branch
        %626 = sbr.rel (%p624) target = $region88
      $region87: #{vdp_forward.2} parent=43 // pred_region
        _
      $region88: #{vdp_forward.2} parent=43 // pred_fallthru
        _
    $region44: #{vdp_forward.2} parent=5 // pred_fallthru
      _
    %p627 = scmp.le.s32.totalorder 2, %s12
    // Predicated region
    $region89: #{vdp_forward.2} parent=5 // pred_check
      %p628 = pneg %p627
    $region90: #{vdp_forward.2} parent=5 // pred_check_branch
      %630 = sbr.rel (%p628) target = $region92
    $region91: #{vdp_forward.2} parent=5 // pred_region
      %s631 = ssub.s32 %s12, 2
    $region92: #{vdp_forward.2} parent=5 // pred_fallthru
      _
  $region6: #{vdp_forward.2} parent=0 // loop_footer
    %s16 = sadd.s32 1, %s12
  $region7: #{vdp_forward.2} parent=0 // loop_footer_branch
    %11 = sbr.rel target = $region3
  $region8: #{vdp_forward.2} parent=0 // loop_exit
    _

// kernel: vdp_forward.3
$region0: #{vdp_forward.3}
  #allocation0 [shape = 'u32[]', space=smem, size = 0x4, offset = 0x4, fixed_abs, tag = 'smem constant byte address 0x4 - core index']
  #allocation1 [shape = 'u32[72,128]{1,0:T(1,128)}', space=vmem, size = 0x9000, scoped, tag = 'internal scratch']
  %s0 = inlined_call_operand.vmem [shape: f32[8,128], index: 0, kind: input, shape index: {}]
  %s1 = inlined_call_operand.vmem [shape: f32[8,12], index: 1, kind: input, shape index: {}]
  %s2 = inlined_call_operand.vmem [shape: f32[12,32], index: 2, kind: input, shape index: {}]
  %s3 = inlined_call_operand.vmem [shape: f32[32,16], index: 3, kind: input, shape index: {}]
  %s4 = inlined_call_operand.vmem [shape: f32[16,8], index: 4, kind: input, shape index: {}]
  %s5 = inlined_call_operand.vmem [shape: f32[8,1], index: 5, kind: input, shape index: {}]
  %s6 = inlined_call_operand.vmem [shape: f32[16,32], index: 6, kind: input, shape index: {}]
  %s7 = inlined_call_operand.vmem [shape: f32[8,16], index: 7, kind: input, shape index: {}]
  %s8 = inlined_call_operand.vmem [shape: f32[24,128], index: 8, kind: input, shape index: {}]
  %s9 = inlined_call_operand.vmem [shape: f32[8,128], index: 9, kind: output, shape index: {}]
  %s10 = sld [smem:[#allocation0]]
  $region46: #{vdp_forward.3} parent=0
    _
  %s12 = ssub.s32 1, %s10
  %s13 = scalar_select 0, %s12, %s10
  // Predicated region
  $region2: #{vdp_forward.3} parent=0 // pred_check
    _
  $region3: #{vdp_forward.3} parent=0 // pred_check_branch
    %15 = sbr.rel (0) target = $region5
  $region4: #{vdp_forward.3} parent=0 // pred_region
    _
  $region5: #{vdp_forward.3} parent=0 // pred_fallthru
    _
  // Predicated region
  $region6: #{vdp_forward.3} parent=0 // pred_check
    _
  $region7: #{vdp_forward.3} parent=0 // pred_check_branch
    %17 = sbr.rel (0) target = $region9
  $region8: #{vdp_forward.3} parent=0 // pred_region
    _
  $region9: #{vdp_forward.3} parent=0 // pred_fallthru
    _
  // Predicated region
  $region10: #{vdp_forward.3} parent=0 // pred_check
    _
  $region11: #{vdp_forward.3} parent=0 // pred_check_branch
    %19 = sbr.rel (0) target = $region13
  $region12: #{vdp_forward.3} parent=0 // pred_region
    _
  $region13: #{vdp_forward.3} parent=0 // pred_fallthru
    _
  // Predicated region
  $region14: #{vdp_forward.3} parent=0 // pred_check
    _
  $region15: #{vdp_forward.3} parent=0 // pred_check_branch
    %21 = sbr.rel (0) target = $region17
  $region16: #{vdp_forward.3} parent=0 // pred_region
    _
  $region17: #{vdp_forward.3} parent=0 // pred_fallthru
    _
  // Predicated region
  $region18: #{vdp_forward.3} parent=0 // pred_check
    _
  $region19: #{vdp_forward.3} parent=0 // pred_check_branch
    %23 = sbr.rel (0) target = $region21
  $region20: #{vdp_forward.3} parent=0 // pred_region
    _
  $region21: #{vdp_forward.3} parent=0 // pred_fallthru
    _
  // Predicated region
  $region22: #{vdp_forward.3} parent=0 // pred_check
    _
  $region23: #{vdp_forward.3} parent=0 // pred_check_branch
    %25 = sbr.rel (0) target = $region25
  $region24: #{vdp_forward.3} parent=0 // pred_region
    _
  $region25: #{vdp_forward.3} parent=0 // pred_fallthru
    _
  // Predicated region
  $region26: #{vdp_forward.3} parent=0 // pred_check
    _
  $region27: #{vdp_forward.3} parent=0 // pred_check_branch
    %27 = sbr.rel (0) target = $region29
  $region28: #{vdp_forward.3} parent=0 // pred_region
    _
  $region29: #{vdp_forward.3} parent=0 // pred_fallthru
    _
  // Predicated region
  $region30: #{vdp_forward.3} parent=0 // pred_check
    _
  $region31: #{vdp_forward.3} parent=0 // pred_check_branch
    %29 = sbr.rel (0) target = $region33
  $region32: #{vdp_forward.3} parent=0 // pred_region
    _
  $region33: #{vdp_forward.3} parent=0 // pred_fallthru
    _
  // Predicated region
  $region34: #{vdp_forward.3} parent=0 // pred_check
    _
  $region35: #{vdp_forward.3} parent=0 // pred_check_branch
    %31 = sbr.rel (0) target = $region37
  $region36: #{vdp_forward.3} parent=0 // pred_region
    _
  $region37: #{vdp_forward.3} parent=0 // pred_fallthru
    _
  %v32 = vld [vmem:[%s0] sm:$0xff]
  %v33 = vld [vmem:[%s8] sm:$0xff]
  %v34 = vld [vmem:[%s8 + $0x8] sm:$0xff]
  %v35 = vld [vmem:[%s8 + $0x10] sm:$0xff]
  %v36 = vld [vmem:[%s1] sm:$0xff]
  %v37 = vld [vmem:[%s2] sm:$0xff]
  %v38 = vld [vmem:[%s2 + $0x8] sm:$0xf]
  %v39 = vld [vmem:[%s3] sm:$0xff]
  %v40 = vld [vmem:[%s3 + $0x8] sm:$0xff]
  %v41 = vld [vmem:[%s3 + $0x10] sm:$0xff]
  %v42 = vld [vmem:[%s3 + $0x18] sm:$0xff]
  %v43 = vld [vmem:[%s4] sm:$0xff]
  %v44 = vld [vmem:[%s4 + $0x8] sm:$0xff]
  %v45 = vld [vmem:[%s5] sm:$0xff]
  %v46 = vld [vmem:[%s6] sm:$0xff]
  %v47 = vld [vmem:[%s6 + $0x8] sm:$0xff]
  %v48 = vld [vmem:[%s7] sm:$0xff]
  %vm49 = vcmp.gt.f32.partialorder %v33, 20.0
  %v50 = vmin.f32 %v33, 20.0
  %v51 = vmul.f32 %v50, 1.442695
  %v52 = vpow.pop %v51
  %v53 = vadd.f32 %v52, 1.0
  %v54 = vlog2.pop %v53
  %v55 = vmul.f32 %v54, 0.6931472
  %v56 = vmul.f32 -0.5, %v52
  %v57 = vadd.f32 %v56, 1.0
  %v58 = vmul.f32 %v57, %v52
  %v59 = vand.u32 2147483647, %v52
  %vm60 = vcmp.lt.f32.partialorder %v59, 0.0004427343
  %v61 = vsel %vm60, %v58, %v55
  %v62 = vsel %vm49, %v33, %v61
  %v63 = vperm.slane %v33, 0
  %vm64 = vcmask 97280
  %v66 = vsel %vm64, %v36, 0
  %vm68 = vcmask 1043456
  %v70 = vsel %vm68, %v38, 0
  %72 = vmatpush.msra.mxu0 0.0
  %73 = vmatpush.msra.mxu0 0.0
  %74 = vmatpush.msra.mxu0 0.0
  %75 = vmatpush.msra.mxu0 0.0
  %76 = vmatpush.msra.mxu0 0.0
  %77 = vmatpush.msra.mxu0 0.0
  %78 = vmatpush.msra.mxu0 0.0
  %79 = vmatpush.msra.mxu0 0.0
  %80 = vmatpush.msra.mxu0 0.0
  %81 = vmatpush.msra.mxu0 0.0
  %82 = vmatpush.msra.mxu0 0.0
  %83 = vmatpush.msra.mxu0 0.0
  %84 = vmatpush.msra.mxu0 0.0
  %85 = vmatpush.msra.mxu0 0.0
  %86 = vmatpush.msra.mxu0 %v70
  %87 = vmatpush.msra.mxu0 %v37
  %88 = vmatmul.f32.gmra.mxu0 %v66
  %v89 = vpop.f32.mrf.mxu0
  %v90 = vadd.f32 %v63, %v89
  %91 = vdwg.mxu0
  %v92 = vmul.f32 %v36, %v36
  %v93 = vsel %vm64, %v92, 0.0
  %94 = vadd.xlane.f32.xlu0 %v93
  %v95 = vpop.xlane.xlu0 %94
  %v96 = vperm.slane %v62, 1
  %v97 = vmul.f32 %v95, %v96
  %v98 = vperm.slane %v32, 0
  %v99 = vsub.f32 %v90, %v98
  %v100 = vperm.slane %v32, 4
  %v101 = vmul.f32 %v99, %v100
  %v102 = vperm.slane %v33, 2
  %v103 = vmul.f32 %v101, %v102
  %v104 = vperm.slane %v33, 3
  %v105 = vadd.f32 %v103, %v104
  %vm106 = vcmp.gt.f32.partialorder %v105, 0.0
  %v107 = vsel %vm106, 1, 0
  %v108 = vcvt.s32.f32 %v107
  %v109 = vmax.f32 %v105, 0.0
  %v110 = vmul.f32 %v97, %v108
  %v111 = vperm.slane %v33, 4
  %vm112 = vcmask 261120
  %v114 = vsel %vm112, %v109, 0
  %116 = vmatpush.msra.mxu0 0.0
  %117 = vmatpush.msra.mxu0 0.0
  %118 = vmatpush.msra.mxu0 0.0
  %119 = vmatpush.msra.mxu0 0.0
  %120 = vmatpush.msra.mxu0 0.0
  %121 = vmatpush.msra.mxu0 0.0
  %122 = vmatpush.msra.mxu0 0.0
  %123 = vmatpush.msra.mxu0 0.0
  %124 = vmatpush.msra.mxu0 0.0
  %125 = vmatpush.msra.mxu0 0.0
  %126 = vmatpush.msra.mxu0 0.0
  %127 = vmatpush.msra.mxu0 0.0
  %128 = vmatpush.msra.mxu0 %v42
  %129 = vmatpush.msra.mxu0 %v41
  %130 = vmatpush.msra.mxu0 %v40
  %131 = vmatpush.msra.mxu0 %v39
  %132 = vmatmul.f32.gmra.mxu0 %v114
  %v133 = vpop.f32.mrf.mxu0
  %v134 = vadd.f32 %v111, %v133
  %135 = vdwg.mxu0
  %v136 = vsel %vm112, %v110, 0.0
  %137 = vadd.xlane.f32.xlu0 %v136
  %v138 = vpop.xlane.xlu0 %137
  %v139 = vmul.f32 %v109, %v109
  %v140 = vsel %vm112, %v139, 0.0
  %141 = vadd.xlane.f32.xlu0 %v140
  %v142 = vpop.xlane.xlu0 %141
  %v143 = vadd.f32 %v138, %v142
  %v144 = vperm.slane %v62, 5
  %v145 = vmul.f32 %v143, %v144
  %v146 = vperm.slane %v32, 1
  %v147 = vsub.f32 %v134, %v146
  %v148 = vperm.slane %v32, 5
  %v149 = vmul.f32 %v147, %v148
  %v150 = vperm.slane %v33, 6
  %v151 = vmul.f32 %v149, %v150
  %v152 = vperm.slane %v33, 7
  %v153 = vadd.f32 %v151, %v152
  %vm154 = vcmp.gt.f32.partialorder %v153, 0.0
  %v155 = vsel %vm154, 1, 0
  %v156 = vcvt.s32.f32 %v155
  %v157 = vmax.f32 %v153, 0.0
  %v158 = vmul.f32 %v156, %v145
  %v159 = vmul.f32 %v39, %v39
  %v160 = vmul.f32 %v40, %v40
  %v161 = vmul.f32 %v41, %v41
  %v162 = vmul.f32 %v42, %v42
  %v164 = vsel %vm112, %v110, 0
  %166 = vmatpush.msra.mxu0 0.0
  %167 = vmatpush.msra.mxu0 0.0
  %168 = vmatpush.msra.mxu0 0.0
  %169 = vmatpush.msra.mxu0 0.0
  %170 = vmatpush.msra.mxu0 0.0
  %171 = vmatpush.msra.mxu0 0.0
  %172 = vmatpush.msra.mxu0 0.0
  %173 = vmatpush.msra.mxu0 0.0
  %174 = vmatpush.msra.mxu0 0.0
  %175 = vmatpush.msra.mxu0 0.0
  %176 = vmatpush.msra.mxu0 0.0
  %177 = vmatpush.msra.mxu0 0.0
  %178 = vmatpush.msra.mxu0 %v162
  %179 = vmatpush.msra.mxu0 %v161
  %180 = vmatpush.msra.mxu0 %v160
  %181 = vmatpush.msra.mxu0 %v159
  %182 = vmatmul.f32.gmra.mxu0 %v164
  %v183 = vpop.f32.mrf.mxu0
  %v184 = vadd.f32 %v145, %v183
  %185 = vdwg.mxu0
  %v186 = vmul.f32 %v156, %v184
  %vm187 = vcmask 130048
  %v188 = vsel %vm187, %v186, 0.0
  %189 = vadd.xlane.f32.xlu0 %v188
  %v190 = vpop.xlane.xlu0 %189
  %vm191 = vcmp.gt.f32.partialorder %v34, 20.0
  %v192 = vmin.f32 %v34, 20.0
  %v193 = vmul.f32 %v192, 1.442695
  %v194 = vpow.pop %v193
  %v195 = vadd.f32 %v194, 1.0
  %v196 = vlog2.pop %v195
  %v197 = vmul.f32 %v196, 0.6931472
  %v198 = vmul.f32 -0.5, %v194
  %v199 = vadd.f32 %v198, 1.0
  %v200 = vmul.f32 %v199, %v194
  %v201 = vand.u32 2147483647, %v194
  %vm202 = vcmp.lt.f32.partialorder %v201, 0.0004427343
  %v203 = vsel %vm202, %v200, %v197
  %v204 = vsel %vm191, %v34, %v203
  %v205 = vperm.slane %v34, 0
  %v207 = vsel %vm187, %v157, 0
  %209 = vmatpush.msra.mxu0 0.0
  %210 = vmatpush.msra.mxu0 0.0
  %211 = vmatpush.msra.mxu0 0.0
  %212 = vmatpush.msra.mxu0 0.0
  %213 = vmatpush.msra.mxu0 0.0
  %214 = vmatpush.msra.mxu0 0.0
  %215 = vmatpush.msra.mxu0 0.0
  %216 = vmatpush.msra.mxu0 0.0
  %217 = vmatpush.msra.mxu0 0.0
  %218 = vmatpush.msra.mxu0 0.0
  %219 = vmatpush.msra.mxu0 0.0
  %220 = vmatpush.msra.mxu0 0.0
  %221 = vmatpush.msra.mxu0 0.0
  %222 = vmatpush.msra.mxu0 0.0
  %223 = vmatpush.msra.mxu0 %v44
  %224 = vmatpush.msra.mxu0 %v43
  %225 = vmatmul.f32.gmra.mxu0 %v207
  %v226 = vpop.f32.mrf.mxu0
  %v227 = vadd.f32 %v205, %v226
  %228 = vdwg.mxu0
  %v229 = vmul.f32 %v157, %v157
  %v230 = vsel %vm187, %v229, 0.0
  %231 = vadd.xlane.f32.xlu0 %v230
  %v232 = vpop.xlane.xlu0 %231
  %v233 = vadd.f32 %v190, %v232
  %v234 = vperm.slane %v204, 1
  %v235 = vmul.f32 %v233, %v234
  %v236 = vperm.slane %v32, 2
  %v237 = vsub.f32 %v227, %v236
  %v238 = vperm.slane %v32, 6
  %v239 = vmul.f32 %v237, %v238
  %v240 = vperm.slane %v34, 2
  %v241 = vmul.f32 %v239, %v240
  %v242 = vperm.slane %v34, 3
  %v243 = vadd.f32 %v241, %v242
  %vm244 = vcmp.gt.f32.partialorder %v243, 0.0
  %v245 = vsel %vm244, 1, 0
  %v246 = vcvt.s32.f32 %v245
  %v247 = vmax.f32 %v243, 0.0
  %v249 = vrot.slane %v156, 1
  %v250 = vrot.slane %v156, 2
  %v251 = vrot.slane %v156, 3
  %v252 = vrot.slane %v156, 4
  %v253 = vrot.slane %v156, 5
  %v254 = vrot.slane %v156, 6
  %v255 = vrot.slane %v156, 7
  %v256 = vperm.slane %v156, 0
  %v257 = vperm.slane %v249, 0
  %v258 = vperm.slane %v250, 0
  %v259 = vperm.slane %v251, 0
  %v260 = vperm.slane %v252, 0
  %v261 = vperm.slane %v253, 0
  %v262 = vperm.slane %v254, 0
  %v263 = vperm.slane %v255, 0
  %v272 = vmul.f32 %v48, %v256
  %v273 = vmul.f32 %v48, %v257
  %v274 = vmul.f32 %v48, %v258
  %v275 = vmul.f32 %v48, %v259
  %v276 = vmul.f32 %v48, %v260
  %v277 = vmul.f32 %v48, %v261
  %v278 = vmul.f32 %v48, %v262
  %v279 = vmul.f32 %v48, %v263
  %v281 = vsel %vm187, %v272, 0
  %v284 = vsel %vm187, %v273, 0
  %v287 = vsel %vm187, %v274, 0
  %v290 = vsel %vm187, %v275, 0
  %v293 = vsel %vm187, %v276, 0
  %v296 = vsel %vm187, %v277, 0
  %v299 = vsel %vm187, %v278, 0
  %v302 = vsel %vm187, %v279, 0
  %304 = vmatpush.msra.mxu0 0.0
  %305 = vmatpush.msra.mxu0 0.0
  %306 = vmatpush.msra.mxu0 0.0
  %307 = vmatpush.msra.mxu0 0.0
  %308 = vmatpush.msra.mxu0 0.0
  %309 = vmatpush.msra.mxu0 0.0
  %310 = vmatpush.msra.mxu0 0.0
  %311 = vmatpush.msra.mxu0 0.0
  %312 = vmatpush.msra.mxu0 0.0
  %313 = vmatpush.msra.mxu0 0.0
  %314 = vmatpush.msra.mxu0 0.0
  %315 = vmatpush.msra.mxu0 0.0
  %316 = vmatpush.msra.mxu0 0.0
  %317 = vmatpush.msra.mxu0 0.0
  %318 = vmatpush.msra.mxu0 %v47
  %319 = vmatpush.msra.mxu0 %v46
  %320 = vmatmul.f32.gmra.mxu0 %v281
  %v321 = vpop.f32.mrf.mxu0
  %v322 = vadd.f32 0.0, %v321
  %323 = vmatmul.f32.gmra.mxu0 %v284
  %v324 = vpop.f32.mrf.mxu0
  %v325 = vadd.f32 0.0, %v324
  %326 = vmatmul.f32.gmra.mxu0 %v287
  %v327 = vpop.f32.mrf.mxu0
  %v328 = vadd.f32 0.0, %v327
  %329 = vmatmul.f32.gmra.mxu0 %v290
  %v330 = vpop.f32.mrf.mxu0
  %v331 = vadd.f32 0.0, %v330
  %332 = vmatmul.f32.gmra.mxu0 %v293
  %v333 = vpop.f32.mrf.mxu0
  %v334 = vadd.f32 0.0, %v333
  %335 = vmatmul.f32.gmra.mxu0 %v296
  %v336 = vpop.f32.mrf.mxu0
  %v337 = vadd.f32 0.0, %v336
  %338 = vmatmul.f32.gmra.mxu0 %v299
  %v339 = vpop.f32.mrf.mxu0
  %v340 = vadd.f32 0.0, %v339
  %341 = vmatmul.f32.gmra.mxu0 %v302
  %v342 = vpop.f32.mrf.mxu0
  %v343 = vadd.f32 0.0, %v342
  %344 = vdwg.mxu0
  %v345 = vmul.f32 %v322, %v322
  %v346 = vmul.f32 %v325, %v325
  %v347 = vmul.f32 %v328, %v328
  %v348 = vmul.f32 %v331, %v331
  %v349 = vmul.f32 %v334, %v334
  %v350 = vmul.f32 %v337, %v337
  %v351 = vmul.f32 %v340, %v340
  %v352 = vmul.f32 %v343, %v343
  %v353 = vrot.slane %v110, 1
  %v354 = vrot.slane %v110, 2
  %v355 = vrot.slane %v110, 3
  %v356 = vrot.slane %v110, 4
  %v357 = vrot.slane %v110, 5
  %v358 = vrot.slane %v110, 6
  %v359 = vrot.slane %v110, 7
  %v360 = vperm.slane %v110, 0
  %v361 = vperm.slane %v353, 0
  %v362 = vperm.slane %v354, 0
  %v363 = vperm.slane %v355, 0
  %v364 = vperm.slane %v356, 0
  %v365 = vperm.slane %v357, 0
  %v366 = vperm.slane %v358, 0
  %v367 = vperm.slane %v359, 0
  %v376 = vmul.f32 %v345, %v360
  %v377 = vmul.f32 %v346, %v361
  %v378 = vmul.f32 %v347, %v362
  %v379 = vmul.f32 %v348, %v363
  %v380 = vmul.f32 %v349, %v364
  %v381 = vmul.f32 %v350, %v365
  %v382 = vmul.f32 %v351, %v366
  %v383 = vmul.f32 %v352, %v367
  %v384 = vsel %vm112, %v376, 0.0
  %385 = vadd.xlane.f32.xlu0 %v384
  %v386 = vpop.xlane.xlu0 %385
  %v387 = vsel %vm112, %v377, 0.0
  %388 = vadd.xlane.f32.xlu0 %v387
  %v389 = vpop.xlane.xlu0 %388
  %v390 = vsel %vm112, %v378, 0.0
  %391 = vadd.xlane.f32.xlu0 %v390
  %v392 = vpop.xlane.xlu0 %391
  %v393 = vsel %vm112, %v379, 0.0
  %394 = vadd.xlane.f32.xlu0 %v393
  %v395 = vpop.xlane.xlu0 %394
  %v396 = vsel %vm112, %v380, 0.0
  %397 = vadd.xlane.f32.xlu0 %v396
  %v398 = vpop.xlane.xlu0 %397
  %v399 = vsel %vm112, %v381, 0.0
  %400 = vadd.xlane.f32.xlu0 %v399
  %v401 = vpop.xlane.xlu0 %400
  %v402 = vsel %vm112, %v382, 0.0
  %403 = vadd.xlane.f32.xlu0 %v402
  %v404 = vpop.xlane.xlu0 %403
  %v405 = vsel %vm112, %v383, 0.0
  %406 = vadd.xlane.f32.xlu0 %v405
  %v407 = vpop.xlane.xlu0 %406
  %v408 = vmul.f32 %v43, %v43
  %v409 = vmul.f32 %v44, %v44
  %v411 = vsel %vm187, %v158, 0
  %413 = vmatpush.msra.mxu0 0.0
  %414 = vmatpush.msra.mxu0 0.0
  %415 = vmatpush.msra.mxu0 0.0
  %416 = vmatpush.msra.mxu0 0.0
  %417 = vmatpush.msra.mxu0 0.0
  %418 = vmatpush.msra.mxu0 0.0
  %419 = vmatpush.msra.mxu0 0.0
  %420 = vmatpush.msra.mxu0 0.0
  %421 = vmatpush.msra.mxu0 0.0
  %422 = vmatpush.msra.mxu0 0.0
  %423 = vmatpush.msra.mxu0 0.0
  %424 = vmatpush.msra.mxu0 0.0
  %425 = vmatpush.msra.mxu0 0.0
  %426 = vmatpush.msra.mxu0 0.0
  %427 = vmatpush.msra.mxu0 %v409
  %428 = vmatpush.msra.mxu0 %v408
  %429 = vmatmul.f32.gmra.mxu0 %v411
  %v430 = vpop.f32.mrf.mxu0
  %v431 = vadd.f32 0.0, %v430
  %432 = vdwg.mxu0
  %v434 = vperm.slane %v431, 0
  %v435 = vlaneseq
  %v436 = vshrl.u32 %v435, 7
  %438 = vset.pattern.permute.xlu0 %v436
  %439 = vperm.xlu0 %438, %v434
  %v440 = vpop.permute.xlu0 %439
  %v441 = vperm.slane %v431, 1
  %v442 = vlaneseq
  %v443 = vshrl.u32 %v442, 7
  %445 = vset.pattern.permute.xlu0 %v443
  %446 = vperm.xlu0 %445, %v441
  %v447 = vpop.permute.xlu0 %446
  %v448 = vperm.slane %v431, 2
  %v449 = vlaneseq
  %v450 = vshrl.u32 %v449, 7
  %452 = vset.pattern.permute.xlu0 %v450
  %453 = vperm.xlu0 %452, %v448
  %v454 = vpop.permute.xlu0 %453
  %v455 = vperm.slane %v431, 3
  %v456 = vlaneseq
  %v457 = vshrl.u32 %v456, 7
  %459 = vset.pattern.permute.xlu0 %v457
  %460 = vperm.xlu0 %459, %v455
  %v461 = vpop.permute.xlu0 %460
  %v462 = vperm.slane %v431, 4
  %v463 = vlaneseq
  %v464 = vshrl.u32 %v463, 7
  %466 = vset.pattern.permute.xlu0 %v464
  %467 = vperm.xlu0 %466, %v462
  %v468 = vpop.permute.xlu0 %467
  %v469 = vperm.slane %v431, 5
  %v470 = vlaneseq
  %v471 = vshrl.u32 %v470, 7
  %473 = vset.pattern.permute.xlu0 %v471
  %474 = vperm.xlu0 %473, %v469
  %v475 = vpop.permute.xlu0 %474
  %v476 = vperm.slane %v431, 6
  %v477 = vlaneseq
  %v478 = vshrl.u32 %v477, 7
  %480 = vset.pattern.permute.xlu0 %v478
  %481 = vperm.xlu0 %480, %v476
  %v482 = vpop.permute.xlu0 %481
  %v483 = vperm.slane %v431, 7
  %v484 = vlaneseq
  %v485 = vshrl.u32 %v484, 7
  %487 = vset.pattern.permute.xlu0 %v485
  %488 = vperm.xlu0 %487, %v483
  %v489 = vpop.permute.xlu0 %488
  %v498 = vadd.f32 %v386, %v440
  %v499 = vadd.f32 %v389, %v447
  %v500 = vadd.f32 %v392, %v454
  %v501 = vadd.f32 %v395, %v461
  %v502 = vadd.f32 %v398, %v468
  %v503 = vadd.f32 %v401, %v475
  %v504 = vadd.f32 %v404, %v482
  %v505 = vadd.f32 %v407, %v489
  %v507 = vperm.slane %v235, 0
  %v508 = vlaneseq
  %v509 = vshrl.u32 %v508, 7
  %511 = vset.pattern.permute.xlu0 %v509
  %512 = vperm.xlu0 %511, %v507
  %v513 = vpop.permute.xlu0 %512
  %v514 = vperm.slane %v235, 1
  %v515 = vlaneseq
  %v516 = vshrl.u32 %v515, 7
  %518 = vset.pattern.permute.xlu0 %v516
  %519 = vperm.xlu0 %518, %v514
  %v520 = vpop.permute.xlu0 %519
  %v521 = vperm.slane %v235, 2
  %v522 = vlaneseq
  %v523 = vshrl.u32 %v522, 7
  %525 = vset.pattern.permute.xlu0 %v523
  %526 = vperm.xlu0 %525, %v521
  %v527 = vpop.permute.xlu0 %526
  %v528 = vperm.slane %v235, 3
  %v529 = vlaneseq
  %v530 = vshrl.u32 %v529, 7
  %532 = vset.pattern.permute.xlu0 %v530
  %533 = vperm.xlu0 %532, %v528
  %v534 = vpop.permute.xlu0 %533
  %v535 = vperm.slane %v235, 4
  %v536 = vlaneseq
  %v537 = vshrl.u32 %v536, 7
  %539 = vset.pattern.permute.xlu0 %v537
  %540 = vperm.xlu0 %539, %v535
  %v541 = vpop.permute.xlu0 %540
  %v542 = vperm.slane %v235, 5
  %v543 = vlaneseq
  %v544 = vshrl.u32 %v543, 7
  %546 = vset.pattern.permute.xlu0 %v544
  %547 = vperm.xlu0 %546, %v542
  %v548 = vpop.permute.xlu0 %547
  %v549 = vperm.slane %v235, 6
  %v550 = vlaneseq
  %v551 = vshrl.u32 %v550, 7
  %553 = vset.pattern.permute.xlu0 %v551
  %554 = vperm.xlu0 %553, %v549
  %v555 = vpop.permute.xlu0 %554
  %v556 = vperm.slane %v235, 7
  %v557 = vlaneseq
  %v558 = vshrl.u32 %v557, 7
  %560 = vset.pattern.permute.xlu0 %v558
  %561 = vperm.xlu0 %560, %v556
  %v562 = vpop.permute.xlu0 %561
  %v571 = vadd.f32 %v498, %v513
  %v572 = vadd.f32 %v499, %v520
  %v573 = vadd.f32 %v500, %v527
  %v574 = vadd.f32 %v501, %v534
  %v575 = vadd.f32 %v502, %v541
  %v576 = vadd.f32 %v503, %v548
  %v577 = vadd.f32 %v504, %v555
  %v578 = vadd.f32 %v505, %v562
  %587 = vset.pattern.permute.xlu0 0
  %588 = vperm.xlu0 %587, %v571
  %v589 = vpop.permute.xlu0 %588
  %590 = vset.pattern.permute.xlu0 0
  %591 = vperm.xlu0 %590, %v572
  %v592 = vpop.permute.xlu0 %591
  %593 = vset.pattern.permute.xlu0 0
  %594 = vperm.xlu0 %593, %v573
  %v595 = vpop.permute.xlu0 %594
  %596 = vset.pattern.permute.xlu0 0
  %597 = vperm.xlu0 %596, %v574
  %v598 = vpop.permute.xlu0 %597
  %599 = vset.pattern.permute.xlu0 0
  %600 = vperm.xlu0 %599, %v575
  %v601 = vpop.permute.xlu0 %600
  %602 = vset.pattern.permute.xlu0 0
  %603 = vperm.xlu0 %602, %v576
  %v604 = vpop.permute.xlu0 %603
  %605 = vset.pattern.permute.xlu0 0
  %606 = vperm.xlu0 %605, %v577
  %v607 = vpop.permute.xlu0 %606
  %608 = vset.pattern.permute.xlu0 0
  %609 = vperm.xlu0 %608, %v578
  %v610 = vpop.permute.xlu0 %609
  %v611 = vlaneseq
  %v612 = vand.u32 %v611, 127
  %v613 = vperm.slane %v589, %v612
  %v614 = vperm.slane %v592, %v612
  %v615 = vperm.slane %v595, %v612
  %v616 = vperm.slane %v598, %v612
  %v617 = vperm.slane %v601, %v612
  %v618 = vperm.slane %v604, %v612
  %v619 = vperm.slane %v607, %v612
  %v620 = vperm.slane %v610, %v612
  %vm621 = vcmask 1041409
  %v622 = vsel %vm621, %v614, %v613
  %vm623 = vcmask 1042434
  %v624 = vsel %vm623, %v615, %v622
  %vm625 = vcmask 1043459
  %v626 = vsel %vm625, %v616, %v624
  %vm627 = vcmask 1044484
  %v628 = vsel %vm627, %v617, %v626
  %vm629 = vcmask 1045509
  %v630 = vsel %vm629, %v618, %v628
  %vm631 = vcmask 1046534
  %v632 = vsel %vm631, %v619, %v630
  %vm633 = vcmask 1047559
  %v634 = vsel %vm633, %v620, %v632
  %v636 = vmul.f32 %v246, %v634
  %vm637 = vcmask 64512
  %v638 = vsel %vm637, %v636, 0.0
  %639 = vadd.xlane.f32.xlu0 %v638
  %v640 = vpop.xlane.xlu0 %639
  %v641 = vperm.slane %v34, 4
  %v643 = vsel %vm637, %v247, 0
  %645 = vmatpush.msra.mxu0 0.0
  %646 = vmatpush.msra.mxu0 0.0
  %647 = vmatpush.msra.mxu0 0.0
  %648 = vmatpush.msra.mxu0 0.0
  %649 = vmatpush.msra.mxu0 0.0
  %650 = vmatpush.msra.mxu0 0.0
  %651 = vmatpush.msra.mxu0 0.0
  %652 = vmatpush.msra.mxu0 0.0
  %653 = vmatpush.msra.mxu0 0.0
  %654 = vmatpush.msra.mxu0 0.0
  %655 = vmatpush.msra.mxu0 0.0
  %656 = vmatpush.msra.mxu0 0.0
  %657 = vmatpush.msra.mxu0 0.0
  %658 = vmatpush.msra.mxu0 0.0
  %659 = vmatpush.msra.mxu0 0.0
  %660 = vmatpush.msra.mxu0 %v45
  %661 = vmatmul.f32.gmra.mxu0 %v643
  %v662 = vpop.f32.mrf.mxu0
  %v663 = vadd.f32 %v641, %v662
  %664 = vdwg.mxu0
  %v665 = vmul.f32 %v247, %v247
  %v666 = vsel %vm637, %v665, 0.0
  %667 = vadd.xlane.f32.xlu0 %v666
  %v668 = vpop.xlane.xlu0 %667
  %v669 = vadd.f32 %v640, %v668
  %v670 = vperm.slane %v204, 5
  %v671 = vmul.f32 %v669, %v670
  %v672 = vperm.slane %v32, 3
  %v673 = vsub.f32 %v663, %v672
  %v674 = vperm.slane %v32, 7
  %v675 = vmul.f32 %v673, %v674
  %v676 = vperm.slane %v34, 6
  %v677 = vmul.f32 %v675, %v676
  %v678 = vperm.slane %v34, 7
  %v679 = vadd.f32 %v677, %v678
  %v680 = vperm.slane %v35, 0
  %v681 = vmul.f32 %v680, %v246
  %v683 = vsel %vm637, %v681, 0
  %685 = vmatpush.msra.mxu0 0.0
  %686 = vmatpush.msra.mxu0 0.0
  %687 = vmatpush.msra.mxu0 0.0
  %688 = vmatpush.msra.mxu0 0.0
  %689 = vmatpush.msra.mxu0 0.0
  %690 = vmatpush.msra.mxu0 0.0
  %691 = vmatpush.msra.mxu0 0.0
  %692 = vmatpush.msra.mxu0 0.0
  %693 = vmatpush.msra.mxu0 0.0
  %694 = vmatpush.msra.mxu0 0.0
  %695 = vmatpush.msra.mxu0 0.0
  %696 = vmatpush.msra.mxu0 0.0
  %697 = vmatpush.msra.mxu0 0.0
  %698 = vmatpush.msra.mxu0 0.0
  %699 = vmatpush.msra.mxu0 0.0
  %700 = vmatpush.msra.mxu0 %v48
  %701 = vmatmul.f32.gmra.mxu0 %v683
  %v702 = vpop.f32.mrf.mxu0
  %v703 = vadd.f32 0.0, %v702
  %704 = vdwg.mxu0
  %v705 = vmul.f32 %v703, %v156
  %v707 = vsel %vm187, %v705, 0
  %709 = vmatpush.msra.mxu0 0.0
  %710 = vmatpush.msra.mxu0 0.0
  %711 = vmatpush.msra.mxu0 0.0
  %712 = vmatpush.msra.mxu0 0.0
  %713 = vmatpush.msra.mxu0 0.0
  %714 = vmatpush.msra.mxu0 0.0
  %715 = vmatpush.msra.mxu0 0.0
  %716 = vmatpush.msra.mxu0 0.0
  %717 = vmatpush.msra.mxu0 0.0
  %718 = vmatpush.msra.mxu0 0.0
  %719 = vmatpush.msra.mxu0 0.0
  %720 = vmatpush.msra.mxu0 0.0
  %721 = vmatpush.msra.mxu0 0.0
  %722 = vmatpush.msra.mxu0 0.0
  %723 = vmatpush.msra.mxu0 %v47
  %724 = vmatpush.msra.mxu0 %v46
  %725 = vmatmul.f32.gmra.mxu0 %v707
  %v726 = vpop.f32.mrf.mxu0
  %v727 = vadd.f32 0.0, %v726
  %728 = vdwg.mxu0
  %v729 = vmul.f32 %v727, %v727
  %v730 = vmul.f32 %v729, %v110
  %v731 = vsel %vm112, %v730, 0.0
  %732 = vadd.xlane.f32.xlu0 %v731
  %v733 = vpop.xlane.xlu0 %732
  %v734 = vmul.f32 %v705, %v705
  %v735 = vmul.f32 %v734, %v145
  %v736 = vsel %vm187, %v735, 0.0
  %737 = vadd.xlane.f32.xlu0 %v736
  %v738 = vpop.xlane.xlu0 %737
  %v739 = vadd.f32 %v733, %v738
  %v740 = vmul.f32 %v681, %v681
  %v741 = vmul.f32 %v740, %v235
  %v742 = vsel %vm637, %v741, 0.0
  %743 = vadd.xlane.f32.xlu0 %v742
  %v744 = vpop.xlane.xlu0 %743
  %v745 = vadd.f32 %v739, %v744
  %v746 = vadd.f32 %v745, %v671
  %747 = vst [vmem:[%s9] sm:$0xff] 0.0
  %vm748 = vcmask 7168
  %749 = vst.msk [vmem:[%s9] sm:$0xff] %vm748, %v679
  %751 = vrot.lane.b32.xlu0 %v746, 1
  %v752 = vpop.permute.xlu0 %751
  %vm754 = vcmask 15368
  %755 = vst.msk [vmem:[%s9] sm:$0xff] %vm754, %v752
  // Predicated region
  $region38: #{vdp_forward.3} parent=0 // pred_check
    _
  $region39: #{vdp_forward.3} parent=0 // pred_check_branch
    %757 = sbr.rel (0) target = $region41
  $region40: #{vdp_forward.3} parent=0 // pred_region
    _
  $region41: #{vdp_forward.3} parent=0 // pred_fallthru
    _
  // Predicated region
  $region42: #{vdp_forward.3} parent=0 // pred_check
    _
  $region43: #{vdp_forward.3} parent=0 // pred_check_branch
    %759 = sbr.rel (0) target = $region45
  $region44: #{vdp_forward.3} parent=0 // pred_region
    _
  $region45: #{vdp_forward.3} parent=0 // pred_fallthru
    _

</llo_original>
